<compile_context>
chip_gen: v7x
topology: tpu7x:2x2x1
jax: 0.10.0
libtpu: 0.0.40
codegen_flags: <defaults>
</compile_context>

<pallas_src>
import jax
import jax.numpy as jnp
from jax.experimental import pallas as pl
from jax.experimental.pallas import tpu as pltpu

LANE = 128


def _conv3x3_relu_kernel(x_ref, w_ref, o_ref, xpad_ref, patch_ref):
    # x_ref:     (1, H, W, Cin)       un-padded NHWC input tile (one image)     [in]
    # w_ref:     (9*Cin, Cout_pad)    im2col weight matrix, bf16, lane-padded   [in]
    # o_ref:     (1, H, W, Cout_pad)  lane-dense output                         [out]
    # xpad_ref:  (H+2, W+2, Cin)      VMEM scratch: zero-padded halo tile
    # patch_ref: (H, W, 9*Cin)        VMEM scratch: im2col patch matrix
    H, W, Cin = x_ref.shape[1], x_ref.shape[2], x_ref.shape[3]
    Cout_pad = o_ref.shape[3]

    # Build the padding=1 halo in VMEM -- no padded copy of the activation in HBM.
    xpad_ref[...] = jnp.zeros_like(xpad_ref)
    xpad_ref[1:H + 1, 1:W + 1, :] = x_ref[0]

    # im2col: lay the 9 shifted 3x3-tap views out along the channel (lane) axis.
    for dy in range(3):
        for dx in range(3):
            t = dy * 3 + dx
            patch_ref[:, :, t * Cin:(t + 1) * Cin] = (
                xpad_ref[dy:dy + H, dx:dx + W, :].astype(patch_ref.dtype))

    # One fused matmul: (H*W, 9*Cin) @ (9*Cin, Cout_pad), bf16 operands, f32 accum.
    patches = patch_ref[...].reshape(H * W, 9 * Cin).astype(jnp.bfloat16)
    acc = jnp.dot(patches, w_ref[...], preferred_element_type=jnp.float32)
    out = jnp.maximum(acc, 0.0)                       # fused ReLU, f32
    o_ref[...] = out.reshape(1, H, W, Cout_pad).astype(o_ref.dtype)


def conv_relu_block_nhwc(x_nhwc, w_hwio):
    """relu(conv2d(x, w, stride=1, padding=1, bias=False)) with NHWC activations.

    x_nhwc: (N, H, W, Cin), w_hwio: (3, 3, Cin, Cout) -> (N, H, W, Cout)
    """
    N, H, W, Cin = x_nhwc.shape
    kh, kw, wcin, Cout = w_hwio.shape
    assert (kh, kw) == (3, 3) and wcin == Cin

    # Lane-dense output / matmul-N dimension.
    Cout_pad = ((Cout + LANE - 1) // LANE) * LANE

    # im2col weight: (3,3,Cin,Cout) -> (9*Cin, Cout_pad), bf16 (MXU-native).
    w_mat = w_hwio.reshape(9 * Cin, Cout).astype(jnp.bfloat16)
    if Cout_pad != Cout:
        w_mat = jnp.pad(w_mat, ((0, 0), (0, Cout_pad - Cout)))

    flops = 2 * N * H * W * 9 * Cin * Cout_pad
    bytes_accessed = (x_nhwc.size * x_nhwc.dtype.itemsize
                      + w_mat.size * 2
                      + N * H * W * Cout_pad * x_nhwc.dtype.itemsize)

    # TODO(synk): for real VDSR sizes (64 ch, 256x256 images) add a row-tiled grid axis
    # with a 2-row halo (marked "parallel" so v7x's second TensorCore gets work) instead
    # of one whole-image block per grid step.
    out_pad = pl.pallas_call(
        _conv3x3_relu_kernel,
        out_shape=jax.ShapeDtypeStruct((N, H, W, Cout_pad), x_nhwc.dtype),
        grid_spec=pltpu.PrefetchScalarGridSpec(
            num_scalar_prefetch=0,
            grid=(N,),
            in_specs=[
                pl.BlockSpec((1, H, W, Cin), lambda n: (n, 0, 0, 0)),
                pl.BlockSpec((9 * Cin, Cout_pad), lambda n: (0, 0)),
            ],
            out_specs=pl.BlockSpec((1, H, W, Cout_pad), lambda n: (n, 0, 0, 0)),
            scratch_shapes=[
                pltpu.VMEM((H + 2, W + 2, Cin), x_nhwc.dtype),   # halo tile
                pltpu.VMEM((H, W, 9 * Cin), x_nhwc.dtype),       # im2col patches
            ],
        ),
        compiler_params=pltpu.CompilerParams(
            dimension_semantics=("parallel",),
        ),
        cost_estimate=pl.CostEstimate(
            flops=flops, transcendentals=0, bytes_accessed=bytes_accessed),
    )(x_nhwc, w_mat)

    if Cout_pad != Cout:
        out_pad = out_pad[..., :Cout]
    return out_pad


def conv_relu_block(x_nchw, weight_oihw):
    """PyTorch-layout adapter: (N,Cin,H,W) x (Cout,Cin,3,3) -> (N,Cout,H,W).

    In a fused multi-layer VDSR the activations should stay NHWC end-to-end; these
    boundary transposes exist only for drop-in PyTorch compatibility.
    """
    x_nhwc = jnp.transpose(x_nchw, (0, 2, 3, 1))
    w_hwio = jnp.transpose(weight_oihw, (2, 3, 1, 0))
    out_nhwc = conv_relu_block_nhwc(x_nhwc, w_hwio)
    return jnp.transpose(out_nhwc, (0, 3, 1, 2))


if __name__ == "__main__":
    # Small shapes consistent with the module: channel_s = 4 in, kernel_s = 4 out.
    N, C_IN, C_OUT, H, W = 2, 4, 4, 16, 16

    key = jax.random.PRNGKey(0)
    kx, kw = jax.random.split(key)
    x_nhwc = jax.random.normal(kx, (N, H, W, C_IN), dtype=jnp.float32)
    w_hwio = jax.random.normal(kw, (3, 3, C_IN, C_OUT), dtype=jnp.float32) * 0.1

    out = conv_relu_block_nhwc(x_nhwc, w_hwio)
    out = jax.block_until_ready(out)
    assert out.shape == (N, H, W, C_OUT)

    # Reference: XLA conv (NHWC/HWIO, SAME padding) + ReLU in f32.
    ref = jax.lax.conv_general_dilated(
        x_nhwc, w_hwio, window_strides=(1, 1), padding="SAME",
        dimension_numbers=("NHWC", "HWIO", "NHWC"))
    ref = jnp.maximum(ref, 0.0)
    # bf16 matmul operands (f32 accumulation) => slightly looser tolerance than pure f32.
    assert jnp.allclose(out, ref, atol=2e-2, rtol=2e-2), "mismatch vs reference conv"

    # PyTorch-layout adapter check (NCHW / OIHW).
    x_nchw = jnp.transpose(x_nhwc, (0, 3, 1, 2))
    w_oihw = jnp.transpose(w_hwio, (3, 2, 0, 1))
    out_nchw = jax.block_until_ready(conv_relu_block(x_nchw, w_oihw))
    assert jnp.allclose(out_nchw, jnp.transpose(ref, (0, 3, 1, 2)),
                        atol=2e-2, rtol=2e-2), "NCHW adapter mismatch"

    print("KERNEL_OK")
</pallas_src>

<mosaic_0001>
module attributes {stable_mosaic.version = 11 : i64} {
  func.func @_conv3x3_relu_kernel(%arg0: i32, %arg1: memref<1x16x16x4xf32, #tpu.memory_space<vmem>>, %arg2: memref<36x128xbf16, #tpu.memory_space<vmem>>, %arg3: memref<1x16x16x128xf32, #tpu.memory_space<vmem>>, %arg4: memref<18x18x4xf32, #tpu.memory_space<vmem>>, %arg5: memref<16x16x36xf32, #tpu.memory_space<vmem>>) attributes {dimension_semantics = [#tpu.dimension_semantics<parallel>], iteration_bounds = array<i64: 2>, scalar_prefetch = 0 : i64, scratch_operands = 2 : i64, tpu.core_type = #tpu.core_type<tc>, window_params = [{transform_indices = @transform_0, window_bounds = array<i64: 1, 16, 16, 4>}, {pipeline_mode = #tpu.pipeline_mode<synchronous>, transform_indices = @transform_1, window_bounds = array<i64: 36, 128>}, {transform_indices = @transform_2, window_bounds = array<i64: 1, 16, 16, 128>}]} {
    %cst = arith.constant 0.000000e+00 : f32
    %0 = vector.broadcast %cst : f32 to vector<18x18x4xf32>
    %c0 = arith.constant 0 : index
    %c0_0 = arith.constant 0 : index
    %c0_1 = arith.constant 0 : index
    %1 = vector.load %arg4[%c0, %c0_0, %c0_1] : memref<18x18x4xf32, #tpu.memory_space<vmem>>, vector<18x18x4xf32>
    tpu.vector_store %arg4[%c0, %c0_0, %c0_1], %0 {strides = array<i32>} : memref<18x18x4xf32, #tpu.memory_space<vmem>>, vector<18x18x4xf32>,
    %c0_2 = arith.constant 0 : index
    %c0_3 = arith.constant 0 : index
    %c0_4 = arith.constant 0 : index
    %c0_5 = arith.constant 0 : index
    %2 = vector.load %arg1[%c0_2, %c0_3, %c0_4, %c0_5] : memref<1x16x16x4xf32, #tpu.memory_space<vmem>>, vector<1x16x16x4xf32>
    %3 = vector.shape_cast %2 : vector<1x16x16x4xf32> to vector<16x16x4xf32>
    %c1 = arith.constant 1 : index
    %c1_6 = arith.constant 1 : index
    %c0_7 = arith.constant 0 : index
    %4 = vector.load %arg4[%c1, %c1_6, %c0_7] : memref<18x18x4xf32, #tpu.memory_space<vmem>>, vector<16x16x4xf32>
    tpu.vector_store %arg4[%c1, %c1_6, %c0_7], %3 {strides = array<i32>} : memref<18x18x4xf32, #tpu.memory_space<vmem>>, vector<16x16x4xf32>,
    %c0_8 = arith.constant 0 : index
    %c0_9 = arith.constant 0 : index
    %c0_10 = arith.constant 0 : index
    %5 = vector.load %arg4[%c0_8, %c0_9, %c0_10] : memref<18x18x4xf32, #tpu.memory_space<vmem>>, vector<16x16x4xf32>
    %c0_11 = arith.constant 0 : index
    %c0_12 = arith.constant 0 : index
    %c0_13 = arith.constant 0 : index
    %6 = vector.load %arg5[%c0_11, %c0_12, %c0_13] : memref<16x16x36xf32, #tpu.memory_space<vmem>>, vector<16x16x4xf32>
    tpu.vector_store %arg5[%c0_11, %c0_12, %c0_13], %5 {strides = array<i32>} : memref<16x16x36xf32, #tpu.memory_space<vmem>>, vector<16x16x4xf32>,
    %c0_14 = arith.constant 0 : index
    %c1_15 = arith.constant 1 : index
    %c0_16 = arith.constant 0 : index
    %7 = vector.load %arg4[%c0_14, %c1_15, %c0_16] : memref<18x18x4xf32, #tpu.memory_space<vmem>>, vector<16x16x4xf32>
    %c0_17 = arith.constant 0 : index
    %c0_18 = arith.constant 0 : index
    %c4 = arith.constant 4 : index
    %8 = vector.load %arg5[%c0_17, %c0_18, %c4] : memref<16x16x36xf32, #tpu.memory_space<vmem>>, vector<16x16x4xf32>
    tpu.vector_store %arg5[%c0_17, %c0_18, %c4], %7 {strides = array<i32>} : memref<16x16x36xf32, #tpu.memory_space<vmem>>, vector<16x16x4xf32>,
    %c0_19 = arith.constant 0 : index
    %c2 = arith.constant 2 : index
    %c0_20 = arith.constant 0 : index
    %9 = vector.load %arg4[%c0_19, %c2, %c0_20] : memref<18x18x4xf32, #tpu.memory_space<vmem>>, vector<16x16x4xf32>
    %c0_21 = arith.constant 0 : index
    %c0_22 = arith.constant 0 : index
    %c8 = arith.constant 8 : index
    %10 = vector.load %arg5[%c0_21, %c0_22, %c8] : memref<16x16x36xf32, #tpu.memory_space<vmem>>, vector<16x16x4xf32>
    tpu.vector_store %arg5[%c0_21, %c0_22, %c8], %9 {strides = array<i32>} : memref<16x16x36xf32, #tpu.memory_space<vmem>>, vector<16x16x4xf32>,
    %c1_23 = arith.constant 1 : index
    %c0_24 = arith.constant 0 : index
    %c0_25 = arith.constant 0 : index
    %11 = vector.load %arg4[%c1_23, %c0_24, %c0_25] : memref<18x18x4xf32, #tpu.memory_space<vmem>>, vector<16x16x4xf32>
    %c0_26 = arith.constant 0 : index
    %c0_27 = arith.constant 0 : index
    %c12 = arith.constant 12 : index
    %12 = vector.load %arg5[%c0_26, %c0_27, %c12] : memref<16x16x36xf32, #tpu.memory_space<vmem>>, vector<16x16x4xf32>
    tpu.vector_store %arg5[%c0_26, %c0_27, %c12], %11 {strides = array<i32>} : memref<16x16x36xf32, #tpu.memory_space<vmem>>, vector<16x16x4xf32>,
    %c1_28 = arith.constant 1 : index
    %c1_29 = arith.constant 1 : index
    %c0_30 = arith.constant 0 : index
    %13 = vector.load %arg4[%c1_28, %c1_29, %c0_30] : memref<18x18x4xf32, #tpu.memory_space<vmem>>, vector<16x16x4xf32>
    %c0_31 = arith.constant 0 : index
    %c0_32 = arith.constant 0 : index
    %c16 = arith.constant 16 : index
    %14 = vector.load %arg5[%c0_31, %c0_32, %c16] : memref<16x16x36xf32, #tpu.memory_space<vmem>>, vector<16x16x4xf32>
    tpu.vector_store %arg5[%c0_31, %c0_32, %c16], %13 {strides = array<i32>} : memref<16x16x36xf32, #tpu.memory_space<vmem>>, vector<16x16x4xf32>,
    %c1_33 = arith.constant 1 : index
    %c2_34 = arith.constant 2 : index
    %c0_35 = arith.constant 0 : index
    %15 = vector.load %arg4[%c1_33, %c2_34, %c0_35] : memref<18x18x4xf32, #tpu.memory_space<vmem>>, vector<16x16x4xf32>
    %c0_36 = arith.constant 0 : index
    %c0_37 = arith.constant 0 : index
    %c20 = arith.constant 20 : index
    %16 = vector.load %arg5[%c0_36, %c0_37, %c20] : memref<16x16x36xf32, #tpu.memory_space<vmem>>, vector<16x16x4xf32>
    tpu.vector_store %arg5[%c0_36, %c0_37, %c20], %15 {strides = array<i32>} : memref<16x16x36xf32, #tpu.memory_space<vmem>>, vector<16x16x4xf32>,
    %c2_38 = arith.constant 2 : index
    %c0_39 = arith.constant 0 : index
    %c0_40 = arith.constant 0 : index
    %17 = vector.load %arg4[%c2_38, %c0_39, %c0_40] : memref<18x18x4xf32, #tpu.memory_space<vmem>>, vector<16x16x4xf32>
    %c0_41 = arith.constant 0 : index
    %c0_42 = arith.constant 0 : index
    %c24 = arith.constant 24 : index
    %18 = vector.load %arg5[%c0_41, %c0_42, %c24] : memref<16x16x36xf32, #tpu.memory_space<vmem>>, vector<16x16x4xf32>
    tpu.vector_store %arg5[%c0_41, %c0_42, %c24], %17 {strides = array<i32>} : memref<16x16x36xf32, #tpu.memory_space<vmem>>, vector<16x16x4xf32>,
    %c2_43 = arith.constant 2 : index
    %c1_44 = arith.constant 1 : index
    %c0_45 = arith.constant 0 : index
    %19 = vector.load %arg4[%c2_43, %c1_44, %c0_45] : memref<18x18x4xf32, #tpu.memory_space<vmem>>, vector<16x16x4xf32>
    %c0_46 = arith.constant 0 : index
    %c0_47 = arith.constant 0 : index
    %c28 = arith.constant 28 : index
    %20 = vector.load %arg5[%c0_46, %c0_47, %c28] : memref<16x16x36xf32, #tpu.memory_space<vmem>>, vector<16x16x4xf32>
    tpu.vector_store %arg5[%c0_46, %c0_47, %c28], %19 {strides = array<i32>} : memref<16x16x36xf32, #tpu.memory_space<vmem>>, vector<16x16x4xf32>,
    %c2_48 = arith.constant 2 : index
    %c2_49 = arith.constant 2 : index
    %c0_50 = arith.constant 0 : index
    %21 = vector.load %arg4[%c2_48, %c2_49, %c0_50] : memref<18x18x4xf32, #tpu.memory_space<vmem>>, vector<16x16x4xf32>
    %c0_51 = arith.constant 0 : index
    %c0_52 = arith.constant 0 : index
    %c32 = arith.constant 32 : index
    %22 = vector.load %arg5[%c0_51, %c0_52, %c32] : memref<16x16x36xf32, #tpu.memory_space<vmem>>, vector<16x16x4xf32>
    tpu.vector_store %arg5[%c0_51, %c0_52, %c32], %21 {strides = array<i32>} : memref<16x16x36xf32, #tpu.memory_space<vmem>>, vector<16x16x4xf32>,
    %c0_53 = arith.constant 0 : index
    %c0_54 = arith.constant 0 : index
    %c0_55 = arith.constant 0 : index
    %23 = vector.load %arg5[%c0_53, %c0_54, %c0_55] : memref<16x16x36xf32, #tpu.memory_space<vmem>>, vector<16x16x36xf32>
    %24 = vector.shape_cast %23 : vector<16x16x36xf32> to vector<256x36xf32>
    %25 = arith.truncf %24 : vector<256x36xf32> to vector<256x36xbf16>
    %c0_56 = arith.constant 0 : index
    %c0_57 = arith.constant 0 : index
    %26 = vector.load %arg2[%c0_56, %c0_57] : memref<36x128xbf16, #tpu.memory_space<vmem>>, vector<36x128xbf16>
    %cst_58 = arith.constant dense<0.000000e+00> : vector<256x128xf32>
    %27 = tpu.matmul %25, %26, %cst_58 {dimension_numbers = #tpu.dot_dimension_numbers<[1], [0], [0], [1], [0, 0, 1, 1], [], []>} : vector<256x36xbf16>, vector<36x128xbf16>, vector<256x128xf32> -> vector<256x128xf32>
    %cst_59 = arith.constant 0.000000e+00 : f32
    %28 = vector.broadcast %cst_59 : f32 to vector<256x128xf32>
    %29 = arith.maximumf %27, %28 : vector<256x128xf32>
    %30 = vector.shape_cast %29 : vector<256x128xf32> to vector<1x16x16x128xf32>
    %c0_60 = arith.constant 0 : index
    %c0_61 = arith.constant 0 : index
    %c0_62 = arith.constant 0 : index
    %c0_63 = arith.constant 0 : index
    %31 = vector.load %arg3[%c0_60, %c0_61, %c0_62, %c0_63] : memref<1x16x16x128xf32, #tpu.memory_space<vmem>>, vector<1x16x16x128xf32>
    tpu.vector_store %arg3[%c0_60, %c0_61, %c0_62, %c0_63], %30 {strides = array<i32>} : memref<1x16x16x128xf32, #tpu.memory_space<vmem>>, vector<1x16x16x128xf32>,
    return
  }
  func.func @transform_0(%arg0: i32) -> (i32, i32, i32, i32) {
    %c0_i32 = arith.constant 0 : i32
    %c0_i32_0 = arith.constant 0 : i32
    %c0_i32_1 = arith.constant 0 : i32
    %c0_i32_2 = arith.constant 0 : i32
    return %arg0, %c0_i32, %c0_i32_0, %c0_i32_1 : i32, i32, i32, i32
  }
  func.func @transform_1(%arg0: i32) -> (i32, i32) {
    %c0_i32 = arith.constant 0 : i32
    %c0_i32_0 = arith.constant 0 : i32
    %c0_i32_1 = arith.constant 0 : i32
    return %c0_i32, %c0_i32_0 : i32, i32
  }
  func.func @transform_2(%arg0: i32) -> (i32, i32, i32, i32) {
    %c0_i32 = arith.constant 0 : i32
    %c0_i32_0 = arith.constant 0 : i32
    %c0_i32_1 = arith.constant 0 : i32
    %c0_i32_2 = arith.constant 0 : i32
    return %arg0, %c0_i32, %c0_i32_0, %c0_i32_1 : i32, i32, i32, i32
  }
}

</mosaic_0001>

<llo_original>
// kernel: tpu_custom_call.1
$region0: #{tpu_custom_call.1}
  #allocation0 [shape = 'u32[]', space=smem, size = 0x4, offset = 0x4, fixed_abs, tag = 'smem constant byte address 0x4 - core index']
  #allocation1 [shape = 'u32[144,128]{1,0:T(1,128)}', space=vmem, size = 0x12000, scoped, tag = 'internal scratch']
  #allocation2 [shape = 'f32[18,18,4]{2,1,0:T(8,128)}', space=vmem, size = 0x36000, scoped, tag = 'scratch operand']
  #allocation3 [shape = 'f32[16,16,36]{2,1,0:T(8,128)}', space=vmem, size = 0x20000, scoped, tag = 'scratch operand']
  %s0 = inlined_call_operand.vmem [shape: f32[2,16,16,4], index: 0, kind: input, shape index: {}]
  %s1 = inlined_call_operand.vmem [shape: bf16[36,128], index: 1, kind: input, shape index: {}]
  %s2 = inlined_call_operand.hbm [shape: f32[2,16,16,128], index: 2, kind: output, shape index: {}]
  %s3 = sld [smem:[#allocation0]]
  $region41: #{tpu_custom_call.1} parent=0
    _
  %s5 = ssub.s32 1, %s3
  %s6 = scalar_select 0, %s5, %s3
  $region1: #{tpu_custom_call.1} parent=0
    #allocation4 [shape = 'u8[262144]{0}', space=vmem, size = 0x40000, scoped, tag = 'output window, operand 0']
    #allocation5 [shape = 's32[2]{0}', space=sflag, size = 0x8, scoped, tag = 'scoped memory for tpu_custom_call.1']
    %7 = vsyncpa [#allocation5], 0
    %s8 = scalar_lea.sflag [#allocation5], 1
    %9 = vsyncpa %s8, 0
    loop: start=0, step=1, limit=4
    $region2: #{tpu_custom_call.1} parent=1 // loop_pre_header
      _
    $region3: #{tpu_custom_call.1} parent=1 // loop_header
      %s11 = sphi 0, %s15
      %p12 = scmp.ge.s32.totalorder %s11, 4
      %s21 = sphi 0, %s23
      %s24 = sphi 0, %s21
      %s25 = sphi 0, %s24
      %s41 = sphi 0, %s25
      %s45 = sphi 0, %s45
      %s47 = sphi 0, %s45
      %s48 = sphi 0, %s47
      %s62 = sphi 0, %s48
      %s68 = sphi 0, %s70
      %s71 = sphi 0, %s68
      %s72 = sphi 0, %s71
      %s88 = sphi 0, %s72
    $region4: #{tpu_custom_call.1} parent=1 // loop_header_branch
      %14 = sbr.rel (%p12) target = $region8
    $region5: #{tpu_custom_call.1} parent=1 // loop_body
      %s16 = ssub.s32 %s11, 1
      %s17 = ssub.s32 %s11, 2
      %s18 = sadd.s32 %s11, 1
      %s19 = ssub.s32 %s11, %s18
      %p20 = scmp.eq.s32.totalorder %s19, 0
      %s22 = sadd.s32 %s21, 1
      %s23 = scalar_select %p20, %s21, %s22
      %p26 = pneg %p20
      %p27 = scmp.eq.s32.totalorder %s11, 1
      %p28 = por %p26, %p27
      %p29 = scmp.ne.s32.totalorder %s21, %s24
      %p30 = scmp.eq.s32.totalorder %s11, 0
      %p31 = por %p29, %p30
      %p32 = scmp.ne.s32.totalorder %s21, %s24
      %p33 = scmp.eq.s32.totalorder %s16, 1
      %p34 = por %p32, %p33
      %p35 = scmp.ne.s32.totalorder %s24, %s25
      %p36 = scmp.eq.s32.totalorder %s16, 0
      %p37 = por %p35, %p36
      %p38 = scmp.ne.s32.totalorder %s24, %s25
      %p39 = scmp.eq.s32.totalorder %s17, 1
      %p40 = por %p38, %p39
      %p42 = scmp.ne.s32.totalorder %s25, %s41
      %p43 = scmp.eq.s32.totalorder %s17, 0
      %p44 = por %p42, %p43
      %s46 = sadd.s32 %s45, 1
      %p49 = scmp.eq.s32.totalorder %s11, 1
      %p50 = scmp.ne.s32.totalorder %s45, %s47
      %p51 = scmp.eq.s32.totalorder %s11, 0
      %p52 = por %p50, %p51
      %p53 = scmp.ne.s32.totalorder %s45, %s47
      %p54 = scmp.eq.s32.totalorder %s16, 1
      %p55 = por %p53, %p54
      %p56 = scmp.ne.s32.totalorder %s47, %s48
      %p57 = scmp.eq.s32.totalorder %s16, 0
      %p58 = por %p56, %p57
      %p59 = scmp.ne.s32.totalorder %s47, %s48
      %p60 = scmp.eq.s32.totalorder %s17, 1
      %p61 = por %p59, %p60
      %p63 = scmp.ne.s32.totalorder %s48, %s62
      %p64 = scmp.eq.s32.totalorder %s17, 0
      %p65 = por %p63, %p64
      %s66 = ssub.s32 %s11, %s18
      %p67 = scmp.eq.s32.totalorder %s66, 0
      %s69 = sadd.s32 %s68, 1
      %s70 = scalar_select %p67, %s68, %s69
      %p73 = pneg %p67
      %p74 = scmp.eq.s32.totalorder %s11, 1
      %p75 = por %p73, %p74
      %p76 = scmp.ne.s32.totalorder %s68, %s71
      %p77 = scmp.eq.s32.totalorder %s11, 0
      %p78 = por %p76, %p77
      %p79 = scmp.ne.s32.totalorder %s68, %s71
      %p80 = scmp.eq.s32.totalorder %s16, 1
      %p81 = por %p79, %p80
      %p82 = scmp.ne.s32.totalorder %s71, %s72
      %p83 = scmp.eq.s32.totalorder %s16, 0
      %p84 = por %p82, %p83
      %p85 = scmp.ne.s32.totalorder %s71, %s72
      %p86 = scmp.eq.s32.totalorder %s17, 1
      %p87 = por %p85, %p86
      %p89 = scmp.ne.s32.totalorder %s72, %s88
      %p90 = scmp.eq.s32.totalorder %s17, 0
      %p91 = por %p89, %p90
      %p92 = scmp.le.s32.totalorder 1, %s11
      %p93 = scmp.lt.s32.totalorder %s11, 3
      %p94 = pnand %p92, %p93
      %p95 = pneg %p94
      // Predicated region
      $region9: #{tpu_custom_call.1} parent=5 // pred_check
        _
      $region10: #{tpu_custom_call.1} parent=5 // pred_check_branch
        %97 = sbr.rel (%p94) target = $region12
      $region11: #{tpu_custom_call.1} parent=5 // pred_region
        %s98 = ssub.s32 %s11, 1
        // Predicated region
        $region13: #{tpu_custom_call.1} parent=11 // pred_check
          %p99 = pneg %p58
        $region14: #{tpu_custom_call.1} parent=11 // pred_check_branch
          %101 = sbr.rel (%p99) target = $region16
        $region15: #{tpu_custom_call.1} parent=11 // pred_region
          _
        $region16: #{tpu_custom_call.1} parent=11 // pred_fallthru
          _
      $region12: #{tpu_custom_call.1} parent=5 // pred_fallthru
        _
      %p102 = scmp.lt.s32.totalorder %s11, 2
      // Predicated region
      $region17: #{tpu_custom_call.1} parent=5 // pred_check
        %p103 = pneg %p102
      $region18: #{tpu_custom_call.1} parent=5 // pred_check_branch
        %105 = sbr.rel (%p103) target = $region20
      $region19: #{tpu_custom_call.1} parent=5 // pred_region
        // Predicated region
        $region21: #{tpu_custom_call.1} parent=19 // pred_check
          %p106 = pneg %p31
        $region22: #{tpu_custom_call.1} parent=19 // pred_check_branch
          %108 = sbr.rel (%p106) target = $region24
        $region23: #{tpu_custom_call.1} parent=19 // pred_region
          %p109 = scmp.lt.s32.totalorder %s11, 1
          %s110 = scalar_select %p109, %s11, 1
          %s111 = smul.addr %s110, 32
          %s112 = smul.addr %s111, 8
          %s113 = scalar_lea.vmem %s0, %s112
        $region24: #{tpu_custom_call.1} parent=19 // pred_fallthru
          _
      $region20: #{tpu_custom_call.1} parent=5 // pred_fallthru
        _
      %p114 = scmp.le.s32.totalorder 1, %s11
      %p115 = scmp.lt.s32.totalorder %s11, 3
      %p116 = pnand %p114, %p115
      %p117 = pneg %p116
      // Predicated region
      $region25: #{tpu_custom_call.1} parent=5 // pred_check
        _
      $region26: #{tpu_custom_call.1} parent=5 // pred_check_branch
        %119 = sbr.rel (%p116) target = $region28
      $region27: #{tpu_custom_call.1} parent=5 // pred_region
        %s120 = ssub.s32 %s11, 1
        %p121 = scmp.lt.s32.totalorder %s16, 1
        %s122 = scalar_select %p121, %s16, 1
        %s123 = smul.addr %s122, 32
        %s124 = smul.addr %s123, 8
        %s125 = scalar_lea.vmem %s0, %s124
        %p126 = pneg %p37
        %p127 = pneg %p34
        %p128 = pneg %p58
        %p129 = pneg %p55
        %p130 = pneg %p84
        %p131 = pneg %p81
        %s132 = sand.u32 %s71, 1
        %s133 = scalar_lea.sflag [#allocation5], %s132
        %s134 = sand.u32 %s71, 1
        %s135 = smul.addr %s134, 256
        %s136 = scalar_lea.vmem [#allocation4], %s135
        %p137 = scmp.lt.s32.totalorder %s16, 1
        %s138 = scalar_select %p137, %s16, 1
        %s139 = smul.addr %s138, 32
        %s140 = smul.addr %s139, 8
        %s141 = scalar_lea.vmem %s0, %s140
        %vm143 = vcmask 31744
        %144 = vst.msk [vmem:[#allocation2] sm:$0xff] %vm143, 0.0
        %145 = vst.msk [vmem:[#allocation2 + $0x8] sm:$0xff] %vm143, 0.0
        %vm146 = vcmask 25600
        %147 = vst.msk [vmem:[#allocation2 + $0x10] sm:$0x3] %vm146, 0.0
        %148 = vst.msk [vmem:[#allocation2 + $0x18] sm:$0xff] %vm143, 0.0
        %149 = vst.msk [vmem:[#allocation2 + $0x20] sm:$0xff] %vm143, 0.0
        %150 = vst.msk [vmem:[#allocation2 + $0x28] sm:$0x3] %vm146, 0.0
        %151 = vst.msk [vmem:[#allocation2 + $0x30] sm:$0xff] %vm143, 0.0
        %152 = vst.msk [vmem:[#allocation2 + $0x38] sm:$0xff] %vm143, 0.0
        %153 = vst.msk [vmem:[#allocation2 + $0x40] sm:$0x3] %vm146, 0.0
        %154 = vst.msk [vmem:[#allocation2 + $0x48] sm:$0xff] %vm143, 0.0
        %155 = vst.msk [vmem:[#allocation2 + $0x50] sm:$0xff] %vm143, 0.0
        %156 = vst.msk [vmem:[#allocation2 + $0x58] sm:$0x3] %vm146, 0.0
        %157 = vst.msk [vmem:[#allocation2 + $0x60] sm:$0xff] %vm143, 0.0
        %158 = vst.msk [vmem:[#allocation2 + $0x68] sm:$0xff] %vm143, 0.0
        %159 = vst.msk [vmem:[#allocation2 + $0x70] sm:$0x3] %vm146, 0.0
        %160 = vst.msk [vmem:[#allocation2 + $0x78] sm:$0xff] %vm143, 0.0
        %161 = vst.msk [vmem:[#allocation2 + $0x80] sm:$0xff] %vm143, 0.0
        %162 = vst.msk [vmem:[#allocation2 + $0x88] sm:$0x3] %vm146, 0.0
        %163 = vst.msk [vmem:[#allocation2 + $0x90] sm:$0xff] %vm143, 0.0
        %164 = vst.msk [vmem:[#allocation2 + $0x98] sm:$0xff] %vm143, 0.0
        %165 = vst.msk [vmem:[#allocation2 + $0xa0] sm:$0x3] %vm146, 0.0
        %166 = vst.msk [vmem:[#allocation2 + $0xa8] sm:$0xff] %vm143, 0.0
        %167 = vst.msk [vmem:[#allocation2 + $0xb0] sm:$0xff] %vm143, 0.0
        %168 = vst.msk [vmem:[#allocation2 + $0xb8] sm:$0x3] %vm146, 0.0
        %169 = vst.msk [vmem:[#allocation2 + $0xc0] sm:$0xff] %vm143, 0.0
        %170 = vst.msk [vmem:[#allocation2 + $0xc8] sm:$0xff] %vm143, 0.0
        %171 = vst.msk [vmem:[#allocation2 + $0xd0] sm:$0x3] %vm146, 0.0
        %172 = vst.msk [vmem:[#allocation2 + $0xd8] sm:$0xff] %vm143, 0.0
        %173 = vst.msk [vmem:[#allocation2 + $0xe0] sm:$0xff] %vm143, 0.0
        %174 = vst.msk [vmem:[#allocation2 + $0xe8] sm:$0x3] %vm146, 0.0
        %175 = vst.msk [vmem:[#allocation2 + $0xf0] sm:$0xff] %vm143, 0.0
        %176 = vst.msk [vmem:[#allocation2 + $0xf8] sm:$0xff] %vm143, 0.0
        %177 = vst.msk [vmem:[#allocation2 + $0x100] sm:$0x3] %vm146, 0.0
        %178 = vst.msk [vmem:[#allocation2 + $0x108] sm:$0xff] %vm143, 0.0
        %179 = vst.msk [vmem:[#allocation2 + $0x110] sm:$0xff] %vm143, 0.0
        %180 = vst.msk [vmem:[#allocation2 + $0x118] sm:$0x3] %vm146, 0.0
        %181 = vst.msk [vmem:[#allocation2 + $0x120] sm:$0xff] %vm143, 0.0
        %182 = vst.msk [vmem:[#allocation2 + $0x128] sm:$0xff] %vm143, 0.0
        %183 = vst.msk [vmem:[#allocation2 + $0x130] sm:$0x3] %vm146, 0.0
        %184 = vst.msk [vmem:[#allocation2 + $0x138] sm:$0xff] %vm143, 0.0
        %185 = vst.msk [vmem:[#allocation2 + $0x140] sm:$0xff] %vm143, 0.0
        %186 = vst.msk [vmem:[#allocation2 + $0x148] sm:$0x3] %vm146, 0.0
        %187 = vst.msk [vmem:[#allocation2 + $0x150] sm:$0xff] %vm143, 0.0
        %188 = vst.msk [vmem:[#allocation2 + $0x158] sm:$0xff] %vm143, 0.0
        %189 = vst.msk [vmem:[#allocation2 + $0x160] sm:$0x3] %vm146, 0.0
        %190 = vst.msk [vmem:[#allocation2 + $0x168] sm:$0xff] %vm143, 0.0
        %191 = vst.msk [vmem:[#allocation2 + $0x170] sm:$0xff] %vm143, 0.0
        %192 = vst.msk [vmem:[#allocation2 + $0x178] sm:$0x3] %vm146, 0.0
        %193 = vst.msk [vmem:[#allocation2 + $0x180] sm:$0xff] %vm143, 0.0
        %194 = vst.msk [vmem:[#allocation2 + $0x188] sm:$0xff] %vm143, 0.0
        %195 = vst.msk [vmem:[#allocation2 + $0x190] sm:$0x3] %vm146, 0.0
        %196 = vst.msk [vmem:[#allocation2 + $0x198] sm:$0xff] %vm143, 0.0
        %197 = vst.msk [vmem:[#allocation2 + $0x1a0] sm:$0xff] %vm143, 0.0
        %198 = vst.msk [vmem:[#allocation2 + $0x1a8] sm:$0x3] %vm146, 0.0
        %v199 = vld [vmem:[%s141] sm:$0xff]
        %v200 = vld [vmem:[%s141 + $0x8] sm:$0xff]
        %v201 = vld [vmem:[%s141 + $0x10] sm:$0xff]
        %v202 = vld [vmem:[%s141 + $0x18] sm:$0xff]
        %v203 = vld [vmem:[%s141 + $0x20] sm:$0xff]
        %v204 = vld [vmem:[%s141 + $0x28] sm:$0xff]
        %v205 = vld [vmem:[%s141 + $0x30] sm:$0xff]
        %v206 = vld [vmem:[%s141 + $0x38] sm:$0xff]
        %v207 = vld [vmem:[%s141 + $0x40] sm:$0xff]
        %v208 = vld [vmem:[%s141 + $0x48] sm:$0xff]
        %v209 = vld [vmem:[%s141 + $0x50] sm:$0xff]
        %v210 = vld [vmem:[%s141 + $0x58] sm:$0xff]
        %v211 = vld [vmem:[%s141 + $0x60] sm:$0xff]
        %v212 = vld [vmem:[%s141 + $0x68] sm:$0xff]
        %v213 = vld [vmem:[%s141 + $0x70] sm:$0xff]
        %v214 = vld [vmem:[%s141 + $0x78] sm:$0xff]
        %v215 = vld [vmem:[%s141 + $0x80] sm:$0xff]
        %v216 = vld [vmem:[%s141 + $0x88] sm:$0xff]
        %v217 = vld [vmem:[%s141 + $0x90] sm:$0xff]
        %v218 = vld [vmem:[%s141 + $0x98] sm:$0xff]
        %v219 = vld [vmem:[%s141 + $0xa0] sm:$0xff]
        %v220 = vld [vmem:[%s141 + $0xa8] sm:$0xff]
        %v221 = vld [vmem:[%s141 + $0xb0] sm:$0xff]
        %v222 = vld [vmem:[%s141 + $0xb8] sm:$0xff]
        %v223 = vld [vmem:[%s141 + $0xc0] sm:$0xff]
        %v224 = vld [vmem:[%s141 + $0xc8] sm:$0xff]
        %v225 = vld [vmem:[%s141 + $0xd0] sm:$0xff]
        %v226 = vld [vmem:[%s141 + $0xd8] sm:$0xff]
        %v227 = vld [vmem:[%s141 + $0xe0] sm:$0xff]
        %v228 = vld [vmem:[%s141 + $0xe8] sm:$0xff]
        %v229 = vld [vmem:[%s141 + $0xf0] sm:$0xff]
        %v230 = vld [vmem:[%s141 + $0xf8] sm:$0xff]
        %s231 = scalar_lea.vmem [#allocation2], 24
        %232 = vst.msk [vmem:[%s231 + $0x1] sm:$0xff] %vm143, %v199
        %233 = vst.msk [vmem:[%s231 + $0x9] sm:$0xff] %vm143, %v200
        %234 = vst.msk [vmem:[%s231 + $0x19] sm:$0xff] %vm143, %v201
        %235 = vst.msk [vmem:[%s231 + $0x21] sm:$0xff] %vm143, %v202
        %236 = vst.msk [vmem:[%s231 + $0x31] sm:$0xff] %vm143, %v203
        %237 = vst.msk [vmem:[%s231 + $0x39] sm:$0xff] %vm143, %v204
        %238 = vst.msk [vmem:[%s231 + $0x49] sm:$0xff] %vm143, %v205
        %239 = vst.msk [vmem:[%s231 + $0x51] sm:$0xff] %vm143, %v206
        %240 = vst.msk [vmem:[%s231 + $0x61] sm:$0xff] %vm143, %v207
        %241 = vst.msk [vmem:[%s231 + $0x69] sm:$0xff] %vm143, %v208
        %242 = vst.msk [vmem:[%s231 + $0x79] sm:$0xff] %vm143, %v209
        %243 = vst.msk [vmem:[%s231 + $0x81] sm:$0xff] %vm143, %v210
        %244 = vst.msk [vmem:[%s231 + $0x91] sm:$0xff] %vm143, %v211
        %245 = vst.msk [vmem:[%s231 + $0x99] sm:$0xff] %vm143, %v212
        %246 = vst.msk [vmem:[%s231 + $0xa9] sm:$0xff] %vm143, %v213
        %247 = vst.msk [vmem:[%s231 + $0xb1] sm:$0xff] %vm143, %v214
        %248 = vst.msk [vmem:[%s231 + $0xc1] sm:$0xff] %vm143, %v215
        %249 = vst.msk [vmem:[%s231 + $0xc9] sm:$0xff] %vm143, %v216
        %250 = vst.msk [vmem:[%s231 + $0xd9] sm:$0xff] %vm143, %v217
        %251 = vst.msk [vmem:[%s231 + $0xe1] sm:$0xff] %vm143, %v218
        %252 = vst.msk [vmem:[%s231 + $0xf1] sm:$0xff] %vm143, %v219
        %253 = vst.msk [vmem:[%s231 + $0xf9] sm:$0xff] %vm143, %v220
        %254 = vst.msk [vmem:[%s231 + $0x109] sm:$0xff] %vm143, %v221
        %255 = vst.msk [vmem:[%s231 + $0x111] sm:$0xff] %vm143, %v222
        %256 = vst.msk [vmem:[%s231 + $0x121] sm:$0xff] %vm143, %v223
        %257 = vst.msk [vmem:[%s231 + $0x129] sm:$0xff] %vm143, %v224
        %258 = vst.msk [vmem:[%s231 + $0x139] sm:$0xff] %vm143, %v225
        %259 = vst.msk [vmem:[%s231 + $0x141] sm:$0xff] %vm143, %v226
        %260 = vst.msk [vmem:[%s231 + $0x151] sm:$0xff] %vm143, %v227
        %261 = vst.msk [vmem:[%s231 + $0x159] sm:$0xff] %vm143, %v228
        %262 = vst.msk [vmem:[%s231 + $0x169] sm:$0xff] %vm143, %v229
        %263 = vst.msk [vmem:[%s231 + $0x171] sm:$0xff] %vm143, %v230
        %v264 = vld [vmem:[#allocation2] sm:$0xff]
        %v265 = vld [vmem:[#allocation2 + $0x8] sm:$0xff]
        %v266 = vld [vmem:[#allocation2 + $0x18] sm:$0xff]
        %v267 = vld [vmem:[#allocation2 + $0x20] sm:$0xff]
        %v268 = vld [vmem:[#allocation2 + $0x30] sm:$0xff]
        %v269 = vld [vmem:[#allocation2 + $0x38] sm:$0xff]
        %v270 = vld [vmem:[#allocation2 + $0x48] sm:$0xff]
        %v271 = vld [vmem:[#allocation2 + $0x50] sm:$0xff]
        %v272 = vld [vmem:[#allocation2 + $0x60] sm:$0xff]
        %v273 = vld [vmem:[#allocation2 + $0x68] sm:$0xff]
        %v274 = vld [vmem:[#allocation2 + $0x78] sm:$0xff]
        %v275 = vld [vmem:[#allocation2 + $0x80] sm:$0xff]
        %v276 = vld [vmem:[#allocation2 + $0x90] sm:$0xff]
        %v277 = vld [vmem:[#allocation2 + $0x98] sm:$0xff]
        %v278 = vld [vmem:[#allocation2 + $0xa8] sm:$0xff]
        %v279 = vld [vmem:[#allocation2 + $0xb0] sm:$0xff]
        %v280 = vld [vmem:[#allocation2 + $0xc0] sm:$0xff]
        %v281 = vld [vmem:[#allocation2 + $0xc8] sm:$0xff]
        %v282 = vld [vmem:[#allocation2 + $0xd8] sm:$0xff]
        %v283 = vld [vmem:[#allocation2 + $0xe0] sm:$0xff]
        %v284 = vld [vmem:[#allocation2 + $0xf0] sm:$0xff]
        %v285 = vld [vmem:[#allocation2 + $0xf8] sm:$0xff]
        %v286 = vld [vmem:[#allocation2 + $0x108] sm:$0xff]
        %v287 = vld [vmem:[#allocation2 + $0x110] sm:$0xff]
        %v288 = vld [vmem:[#allocation2 + $0x120] sm:$0xff]
        %v289 = vld [vmem:[#allocation2 + $0x128] sm:$0xff]
        %v290 = vld [vmem:[#allocation2 + $0x138] sm:$0xff]
        %v291 = vld [vmem:[#allocation2 + $0x140] sm:$0xff]
        %v292 = vld [vmem:[#allocation2 + $0x150] sm:$0xff]
        %v293 = vld [vmem:[#allocation2 + $0x158] sm:$0xff]
        %v294 = vld [vmem:[#allocation2 + $0x168] sm:$0xff]
        %v295 = vld [vmem:[#allocation2 + $0x170] sm:$0xff]
        %296 = vst.msk [vmem:[#allocation3] sm:$0xff] %vm143, %v264
        %297 = vst.msk [vmem:[#allocation3 + $0x8] sm:$0xff] %vm143, %v265
        %298 = vst.msk [vmem:[#allocation3 + $0x10] sm:$0xff] %vm143, %v266
        %299 = vst.msk [vmem:[#allocation3 + $0x18] sm:$0xff] %vm143, %v267
        %300 = vst.msk [vmem:[#allocation3 + $0x20] sm:$0xff] %vm143, %v268
        %301 = vst.msk [vmem:[#allocation3 + $0x28] sm:$0xff] %vm143, %v269
        %302 = vst.msk [vmem:[#allocation3 + $0x30] sm:$0xff] %vm143, %v270
        %303 = vst.msk [vmem:[#allocation3 + $0x38] sm:$0xff] %vm143, %v271
        %304 = vst.msk [vmem:[#allocation3 + $0x40] sm:$0xff] %vm143, %v272
        %305 = vst.msk [vmem:[#allocation3 + $0x48] sm:$0xff] %vm143, %v273
        %306 = vst.msk [vmem:[#allocation3 + $0x50] sm:$0xff] %vm143, %v274
        %307 = vst.msk [vmem:[#allocation3 + $0x58] sm:$0xff] %vm143, %v275
        %308 = vst.msk [vmem:[#allocation3 + $0x60] sm:$0xff] %vm143, %v276
        %309 = vst.msk [vmem:[#allocation3 + $0x68] sm:$0xff] %vm143, %v277
        %310 = vst.msk [vmem:[#allocation3 + $0x70] sm:$0xff] %vm143, %v278
        %311 = vst.msk [vmem:[#allocation3 + $0x78] sm:$0xff] %vm143, %v279
        %312 = vst.msk [vmem:[#allocation3 + $0x80] sm:$0xff] %vm143, %v280
        %313 = vst.msk [vmem:[#allocation3 + $0x88] sm:$0xff] %vm143, %v281
        %314 = vst.msk [vmem:[#allocation3 + $0x90] sm:$0xff] %vm143, %v282
        %315 = vst.msk [vmem:[#allocation3 + $0x98] sm:$0xff] %vm143, %v283
        %316 = vst.msk [vmem:[#allocation3 + $0xa0] sm:$0xff] %vm143, %v284
        %317 = vst.msk [vmem:[#allocation3 + $0xa8] sm:$0xff] %vm143, %v285
        %318 = vst.msk [vmem:[#allocation3 + $0xb0] sm:$0xff] %vm143, %v286
        %319 = vst.msk [vmem:[#allocation3 + $0xb8] sm:$0xff] %vm143, %v287
        %320 = vst.msk [vmem:[#allocation3 + $0xc0] sm:$0xff] %vm143, %v288
        %321 = vst.msk [vmem:[#allocation3 + $0xc8] sm:$0xff] %vm143, %v289
        %322 = vst.msk [vmem:[#allocation3 + $0xd0] sm:$0xff] %vm143, %v290
        %323 = vst.msk [vmem:[#allocation3 + $0xd8] sm:$0xff] %vm143, %v291
        %324 = vst.msk [vmem:[#allocation3 + $0xe0] sm:$0xff] %vm143, %v292
        %325 = vst.msk [vmem:[#allocation3 + $0xe8] sm:$0xff] %vm143, %v293
        %326 = vst.msk [vmem:[#allocation3 + $0xf0] sm:$0xff] %vm143, %v294
        %327 = vst.msk [vmem:[#allocation3 + $0xf8] sm:$0xff] %vm143, %v295
        %v328 = vld [vmem:[#allocation2 + $0x1] sm:$0xff]
        %v329 = vld [vmem:[#allocation2 + $0x9] sm:$0xff]
        %v330 = vld [vmem:[#allocation2 + $0x19] sm:$0xff]
        %v331 = vld [vmem:[#allocation2 + $0x21] sm:$0xff]
        %v332 = vld [vmem:[#allocation2 + $0x31] sm:$0xff]
        %v333 = vld [vmem:[#allocation2 + $0x39] sm:$0xff]
        %v334 = vld [vmem:[#allocation2 + $0x49] sm:$0xff]
        %v335 = vld [vmem:[#allocation2 + $0x51] sm:$0xff]
        %v336 = vld [vmem:[#allocation2 + $0x61] sm:$0xff]
        %v337 = vld [vmem:[#allocation2 + $0x69] sm:$0xff]
        %v338 = vld [vmem:[#allocation2 + $0x79] sm:$0xff]
        %v339 = vld [vmem:[#allocation2 + $0x81] sm:$0xff]
        %v340 = vld [vmem:[#allocation2 + $0x91] sm:$0xff]
        %v341 = vld [vmem:[#allocation2 + $0x99] sm:$0xff]
        %v342 = vld [vmem:[#allocation2 + $0xa9] sm:$0xff]
        %v343 = vld [vmem:[#allocation2 + $0xb1] sm:$0xff]
        %v344 = vld [vmem:[#allocation2 + $0xc1] sm:$0xff]
        %v345 = vld [vmem:[#allocation2 + $0xc9] sm:$0xff]
        %v346 = vld [vmem:[#allocation2 + $0xd9] sm:$0xff]
        %v347 = vld [vmem:[#allocation2 + $0xe1] sm:$0xff]
        %v348 = vld [vmem:[#allocation2 + $0xf1] sm:$0xff]
        %v349 = vld [vmem:[#allocation2 + $0xf9] sm:$0xff]
        %v350 = vld [vmem:[#allocation2 + $0x109] sm:$0xff]
        %v351 = vld [vmem:[#allocation2 + $0x111] sm:$0xff]
        %v352 = vld [vmem:[#allocation2 + $0x121] sm:$0xff]
        %v353 = vld [vmem:[#allocation2 + $0x129] sm:$0xff]
        %v354 = vld [vmem:[#allocation2 + $0x139] sm:$0xff]
        %v355 = vld [vmem:[#allocation2 + $0x141] sm:$0xff]
        %v356 = vld [vmem:[#allocation2 + $0x151] sm:$0xff]
        %v357 = vld [vmem:[#allocation2 + $0x159] sm:$0xff]
        %v358 = vld [vmem:[#allocation2 + $0x169] sm:$0xff]
        %v359 = vld [vmem:[#allocation2 + $0x171] sm:$0xff]
        %392 = vrot.lane.b32.xlu0 %v328, 4
        %v393 = vpop.permute.xlu0 %392
        %394 = vrot.lane.b32.xlu0 %v329, 4
        %v395 = vpop.permute.xlu0 %394
        %396 = vrot.lane.b32.xlu0 %v330, 4
        %v397 = vpop.permute.xlu0 %396
        %398 = vrot.lane.b32.xlu0 %v331, 4
        %v399 = vpop.permute.xlu0 %398
        %400 = vrot.lane.b32.xlu0 %v332, 4
        %v401 = vpop.permute.xlu0 %400
        %402 = vrot.lane.b32.xlu0 %v333, 4
        %v403 = vpop.permute.xlu0 %402
        %404 = vrot.lane.b32.xlu0 %v334, 4
        %v405 = vpop.permute.xlu0 %404
        %406 = vrot.lane.b32.xlu0 %v335, 4
        %v407 = vpop.permute.xlu0 %406
        %408 = vrot.lane.b32.xlu0 %v336, 4
        %v409 = vpop.permute.xlu0 %408
        %410 = vrot.lane.b32.xlu0 %v337, 4
        %v411 = vpop.permute.xlu0 %410
        %412 = vrot.lane.b32.xlu0 %v338, 4
        %v413 = vpop.permute.xlu0 %412
        %414 = vrot.lane.b32.xlu0 %v339, 4
        %v415 = vpop.permute.xlu0 %414
        %416 = vrot.lane.b32.xlu0 %v340, 4
        %v417 = vpop.permute.xlu0 %416
        %418 = vrot.lane.b32.xlu0 %v341, 4
        %v419 = vpop.permute.xlu0 %418
        %420 = vrot.lane.b32.xlu0 %v342, 4
        %v421 = vpop.permute.xlu0 %420
        %422 = vrot.lane.b32.xlu0 %v343, 4
        %v423 = vpop.permute.xlu0 %422
        %424 = vrot.lane.b32.xlu0 %v344, 4
        %v425 = vpop.permute.xlu0 %424
        %426 = vrot.lane.b32.xlu0 %v345, 4
        %v427 = vpop.permute.xlu0 %426
        %428 = vrot.lane.b32.xlu0 %v346, 4
        %v429 = vpop.permute.xlu0 %428
        %430 = vrot.lane.b32.xlu0 %v347, 4
        %v431 = vpop.permute.xlu0 %430
        %432 = vrot.lane.b32.xlu0 %v348, 4
        %v433 = vpop.permute.xlu0 %432
        %434 = vrot.lane.b32.xlu0 %v349, 4
        %v435 = vpop.permute.xlu0 %434
        %436 = vrot.lane.b32.xlu0 %v350, 4
        %v437 = vpop.permute.xlu0 %436
        %438 = vrot.lane.b32.xlu0 %v351, 4
        %v439 = vpop.permute.xlu0 %438
        %440 = vrot.lane.b32.xlu0 %v352, 4
        %v441 = vpop.permute.xlu0 %440
        %442 = vrot.lane.b32.xlu0 %v353, 4
        %v443 = vpop.permute.xlu0 %442
        %444 = vrot.lane.b32.xlu0 %v354, 4
        %v445 = vpop.permute.xlu0 %444
        %446 = vrot.lane.b32.xlu0 %v355, 4
        %v447 = vpop.permute.xlu0 %446
        %448 = vrot.lane.b32.xlu0 %v356, 4
        %v449 = vpop.permute.xlu0 %448
        %450 = vrot.lane.b32.xlu0 %v357, 4
        %v451 = vpop.permute.xlu0 %450
        %452 = vrot.lane.b32.xlu0 %v358, 4
        %v453 = vpop.permute.xlu0 %452
        %454 = vrot.lane.b32.xlu0 %v359, 4
        %v455 = vpop.permute.xlu0 %454
        %vm488 = vcmask 64544
        %489 = vst.msk [vmem:[#allocation3] sm:$0xff] %vm488, %v393
        %490 = vst.msk [vmem:[#allocation3 + $0x8] sm:$0xff] %vm488, %v395
        %491 = vst.msk [vmem:[#allocation3 + $0x10] sm:$0xff] %vm488, %v397
        %492 = vst.msk [vmem:[#allocation3 + $0x18] sm:$0xff] %vm488, %v399
        %493 = vst.msk [vmem:[#allocation3 + $0x20] sm:$0xff] %vm488, %v401
        %494 = vst.msk [vmem:[#allocation3 + $0x28] sm:$0xff] %vm488, %v403
        %495 = vst.msk [vmem:[#allocation3 + $0x30] sm:$0xff] %vm488, %v405
        %496 = vst.msk [vmem:[#allocation3 + $0x38] sm:$0xff] %vm488, %v407
        %497 = vst.msk [vmem:[#allocation3 + $0x40] sm:$0xff] %vm488, %v409
        %498 = vst.msk [vmem:[#allocation3 + $0x48] sm:$0xff] %vm488, %v411
        %499 = vst.msk [vmem:[#allocation3 + $0x50] sm:$0xff] %vm488, %v413
        %500 = vst.msk [vmem:[#allocation3 + $0x58] sm:$0xff] %vm488, %v415
        %501 = vst.msk [vmem:[#allocation3 + $0x60] sm:$0xff] %vm488, %v417
        %502 = vst.msk [vmem:[#allocation3 + $0x68] sm:$0xff] %vm488, %v419
        %503 = vst.msk [vmem:[#allocation3 + $0x70] sm:$0xff] %vm488, %v421
        %504 = vst.msk [vmem:[#allocation3 + $0x78] sm:$0xff] %vm488, %v423
        %505 = vst.msk [vmem:[#allocation3 + $0x80] sm:$0xff] %vm488, %v425
        %506 = vst.msk [vmem:[#allocation3 + $0x88] sm:$0xff] %vm488, %v427
        %507 = vst.msk [vmem:[#allocation3 + $0x90] sm:$0xff] %vm488, %v429
        %508 = vst.msk [vmem:[#allocation3 + $0x98] sm:$0xff] %vm488, %v431
        %509 = vst.msk [vmem:[#allocation3 + $0xa0] sm:$0xff] %vm488, %v433
        %510 = vst.msk [vmem:[#allocation3 + $0xa8] sm:$0xff] %vm488, %v435
        %511 = vst.msk [vmem:[#allocation3 + $0xb0] sm:$0xff] %vm488, %v437
        %512 = vst.msk [vmem:[#allocation3 + $0xb8] sm:$0xff] %vm488, %v439
        %513 = vst.msk [vmem:[#allocation3 + $0xc0] sm:$0xff] %vm488, %v441
        %514 = vst.msk [vmem:[#allocation3 + $0xc8] sm:$0xff] %vm488, %v443
        %515 = vst.msk [vmem:[#allocation3 + $0xd0] sm:$0xff] %vm488, %v445
        %516 = vst.msk [vmem:[#allocation3 + $0xd8] sm:$0xff] %vm488, %v447
        %517 = vst.msk [vmem:[#allocation3 + $0xe0] sm:$0xff] %vm488, %v449
        %518 = vst.msk [vmem:[#allocation3 + $0xe8] sm:$0xff] %vm488, %v451
        %519 = vst.msk [vmem:[#allocation3 + $0xf0] sm:$0xff] %vm488, %v453
        %520 = vst.msk [vmem:[#allocation3 + $0xf8] sm:$0xff] %vm488, %v455
        %v521 = vld [vmem:[#allocation2 + $0x2] sm:$0xff]
        %v522 = vld [vmem:[#allocation2 + $0xa] sm:$0xff]
        %v523 = vld [vmem:[#allocation2 + $0x1a] sm:$0xff]
        %v524 = vld [vmem:[#allocation2 + $0x22] sm:$0xff]
        %v525 = vld [vmem:[#allocation2 + $0x32] sm:$0xff]
        %v526 = vld [vmem:[#allocation2 + $0x3a] sm:$0xff]
        %v527 = vld [vmem:[#allocation2 + $0x4a] sm:$0xff]
        %v528 = vld [vmem:[#allocation2 + $0x52] sm:$0xff]
        %v529 = vld [vmem:[#allocation2 + $0x62] sm:$0xff]
        %v530 = vld [vmem:[#allocation2 + $0x6a] sm:$0xff]
        %v531 = vld [vmem:[#allocation2 + $0x7a] sm:$0xff]
        %v532 = vld [vmem:[#allocation2 + $0x82] sm:$0xff]
        %v533 = vld [vmem:[#allocation2 + $0x92] sm:$0xff]
        %v534 = vld [vmem:[#allocation2 + $0x9a] sm:$0xff]
        %v535 = vld [vmem:[#allocation2 + $0xaa] sm:$0xff]
        %v536 = vld [vmem:[#allocation2 + $0xb2] sm:$0xff]
        %v537 = vld [vmem:[#allocation2 + $0xc2] sm:$0xff]
        %v538 = vld [vmem:[#allocation2 + $0xca] sm:$0xff]
        %v539 = vld [vmem:[#allocation2 + $0xda] sm:$0xff]
        %v540 = vld [vmem:[#allocation2 + $0xe2] sm:$0xff]
        %v541 = vld [vmem:[#allocation2 + $0xf2] sm:$0xff]
        %v542 = vld [vmem:[#allocation2 + $0xfa] sm:$0xff]
        %v543 = vld [vmem:[#allocation2 + $0x10a] sm:$0xff]
        %v544 = vld [vmem:[#allocation2 + $0x112] sm:$0xff]
        %v545 = vld [vmem:[#allocation2 + $0x122] sm:$0xff]
        %v546 = vld [vmem:[#allocation2 + $0x12a] sm:$0xff]
        %v547 = vld [vmem:[#allocation2 + $0x13a] sm:$0xff]
        %v548 = vld [vmem:[#allocation2 + $0x142] sm:$0xff]
        %v549 = vld [vmem:[#allocation2 + $0x152] sm:$0xff]
        %v550 = vld [vmem:[#allocation2 + $0x15a] sm:$0xff]
        %v551 = vld [vmem:[#allocation2 + $0x16a] sm:$0xff]
        %v552 = vld [vmem:[#allocation2 + $0x172] sm:$0xff]
        %585 = vrot.lane.b32.xlu0 %v521, 8
        %v586 = vpop.permute.xlu0 %585
        %587 = vrot.lane.b32.xlu0 %v522, 8
        %v588 = vpop.permute.xlu0 %587
        %589 = vrot.lane.b32.xlu0 %v523, 8
        %v590 = vpop.permute.xlu0 %589
        %591 = vrot.lane.b32.xlu0 %v524, 8
        %v592 = vpop.permute.xlu0 %591
        %593 = vrot.lane.b32.xlu0 %v525, 8
        %v594 = vpop.permute.xlu0 %593
        %595 = vrot.lane.b32.xlu0 %v526, 8
        %v596 = vpop.permute.xlu0 %595
        %597 = vrot.lane.b32.xlu0 %v527, 8
        %v598 = vpop.permute.xlu0 %597
        %599 = vrot.lane.b32.xlu0 %v528, 8
        %v600 = vpop.permute.xlu0 %599
        %601 = vrot.lane.b32.xlu0 %v529, 8
        %v602 = vpop.permute.xlu0 %601
        %603 = vrot.lane.b32.xlu0 %v530, 8
        %v604 = vpop.permute.xlu0 %603
        %605 = vrot.lane.b32.xlu0 %v531, 8
        %v606 = vpop.permute.xlu0 %605
        %607 = vrot.lane.b32.xlu0 %v532, 8
        %v608 = vpop.permute.xlu0 %607
        %609 = vrot.lane.b32.xlu0 %v533, 8
        %v610 = vpop.permute.xlu0 %609
        %611 = vrot.lane.b32.xlu0 %v534, 8
        %v612 = vpop.permute.xlu0 %611
        %613 = vrot.lane.b32.xlu0 %v535, 8
        %v614 = vpop.permute.xlu0 %613
        %615 = vrot.lane.b32.xlu0 %v536, 8
        %v616 = vpop.permute.xlu0 %615
        %617 = vrot.lane.b32.xlu0 %v537, 8
        %v618 = vpop.permute.xlu0 %617
        %619 = vrot.lane.b32.xlu0 %v538, 8
        %v620 = vpop.permute.xlu0 %619
        %621 = vrot.lane.b32.xlu0 %v539, 8
        %v622 = vpop.permute.xlu0 %621
        %623 = vrot.lane.b32.xlu0 %v540, 8
        %v624 = vpop.permute.xlu0 %623
        %625 = vrot.lane.b32.xlu0 %v541, 8
        %v626 = vpop.permute.xlu0 %625
        %627 = vrot.lane.b32.xlu0 %v542, 8
        %v628 = vpop.permute.xlu0 %627
        %629 = vrot.lane.b32.xlu0 %v543, 8
        %v630 = vpop.permute.xlu0 %629
        %631 = vrot.lane.b32.xlu0 %v544, 8
        %v632 = vpop.permute.xlu0 %631
        %633 = vrot.lane.b32.xlu0 %v545, 8
        %v634 = vpop.permute.xlu0 %633
        %635 = vrot.lane.b32.xlu0 %v546, 8
        %v636 = vpop.permute.xlu0 %635
        %637 = vrot.lane.b32.xlu0 %v547, 8
        %v638 = vpop.permute.xlu0 %637
        %639 = vrot.lane.b32.xlu0 %v548, 8
        %v640 = vpop.permute.xlu0 %639
        %641 = vrot.lane.b32.xlu0 %v549, 8
        %v642 = vpop.permute.xlu0 %641
        %643 = vrot.lane.b32.xlu0 %v550, 8
        %v644 = vpop.permute.xlu0 %643
        %645 = vrot.lane.b32.xlu0 %v551, 8
        %v646 = vpop.permute.xlu0 %645
        %647 = vrot.lane.b32.xlu0 %v552, 8
        %v648 = vpop.permute.xlu0 %647
        %vm681 = vcmask 97344
        %682 = vst.msk [vmem:[#allocation3] sm:$0xff] %vm681, %v586
        %683 = vst.msk [vmem:[#allocation3 + $0x8] sm:$0xff] %vm681, %v588
        %684 = vst.msk [vmem:[#allocation3 + $0x10] sm:$0xff] %vm681, %v590
        %685 = vst.msk [vmem:[#allocation3 + $0x18] sm:$0xff] %vm681, %v592
        %686 = vst.msk [vmem:[#allocation3 + $0x20] sm:$0xff] %vm681, %v594
        %687 = vst.msk [vmem:[#allocation3 + $0x28] sm:$0xff] %vm681, %v596
        %688 = vst.msk [vmem:[#allocation3 + $0x30] sm:$0xff] %vm681, %v598
        %689 = vst.msk [vmem:[#allocation3 + $0x38] sm:$0xff] %vm681, %v600
        %690 = vst.msk [vmem:[#allocation3 + $0x40] sm:$0xff] %vm681, %v602
        %691 = vst.msk [vmem:[#allocation3 + $0x48] sm:$0xff] %vm681, %v604
        %692 = vst.msk [vmem:[#allocation3 + $0x50] sm:$0xff] %vm681, %v606
        %693 = vst.msk [vmem:[#allocation3 + $0x58] sm:$0xff] %vm681, %v608
        %694 = vst.msk [vmem:[#allocation3 + $0x60] sm:$0xff] %vm681, %v610
        %695 = vst.msk [vmem:[#allocation3 + $0x68] sm:$0xff] %vm681, %v612
        %696 = vst.msk [vmem:[#allocation3 + $0x70] sm:$0xff] %vm681, %v614
        %697 = vst.msk [vmem:[#allocation3 + $0x78] sm:$0xff] %vm681, %v616
        %698 = vst.msk [vmem:[#allocation3 + $0x80] sm:$0xff] %vm681, %v618
        %699 = vst.msk [vmem:[#allocation3 + $0x88] sm:$0xff] %vm681, %v620
        %700 = vst.msk [vmem:[#allocation3 + $0x90] sm:$0xff] %vm681, %v622
        %701 = vst.msk [vmem:[#allocation3 + $0x98] sm:$0xff] %vm681, %v624
        %702 = vst.msk [vmem:[#allocation3 + $0xa0] sm:$0xff] %vm681, %v626
        %703 = vst.msk [vmem:[#allocation3 + $0xa8] sm:$0xff] %vm681, %v628
        %704 = vst.msk [vmem:[#allocation3 + $0xb0] sm:$0xff] %vm681, %v630
        %705 = vst.msk [vmem:[#allocation3 + $0xb8] sm:$0xff] %vm681, %v632
        %706 = vst.msk [vmem:[#allocation3 + $0xc0] sm:$0xff] %vm681, %v634
        %707 = vst.msk [vmem:[#allocation3 + $0xc8] sm:$0xff] %vm681, %v636
        %708 = vst.msk [vmem:[#allocation3 + $0xd0] sm:$0xff] %vm681, %v638
        %709 = vst.msk [vmem:[#allocation3 + $0xd8] sm:$0xff] %vm681, %v640
        %710 = vst.msk [vmem:[#allocation3 + $0xe0] sm:$0xff] %vm681, %v642
        %711 = vst.msk [vmem:[#allocation3 + $0xe8] sm:$0xff] %vm681, %v644
        %712 = vst.msk [vmem:[#allocation3 + $0xf0] sm:$0xff] %vm681, %v646
        %713 = vst.msk [vmem:[#allocation3 + $0xf8] sm:$0xff] %vm681, %v648
        %v714 = vld [vmem:[%s231] sm:$0xff]
        %v715 = vld [vmem:[%s231 + $0x8] sm:$0xff]
        %v716 = vld [vmem:[%s231 + $0x18] sm:$0xff]
        %v717 = vld [vmem:[%s231 + $0x20] sm:$0xff]
        %v718 = vld [vmem:[%s231 + $0x30] sm:$0xff]
        %v719 = vld [vmem:[%s231 + $0x38] sm:$0xff]
        %v720 = vld [vmem:[%s231 + $0x48] sm:$0xff]
        %v721 = vld [vmem:[%s231 + $0x50] sm:$0xff]
        %v722 = vld [vmem:[%s231 + $0x60] sm:$0xff]
        %v723 = vld [vmem:[%s231 + $0x68] sm:$0xff]
        %v724 = vld [vmem:[%s231 + $0x78] sm:$0xff]
        %v725 = vld [vmem:[%s231 + $0x80] sm:$0xff]
        %v726 = vld [vmem:[%s231 + $0x90] sm:$0xff]
        %v727 = vld [vmem:[%s231 + $0x98] sm:$0xff]
        %v728 = vld [vmem:[%s231 + $0xa8] sm:$0xff]
        %v729 = vld [vmem:[%s231 + $0xb0] sm:$0xff]
        %v730 = vld [vmem:[%s231 + $0xc0] sm:$0xff]
        %v731 = vld [vmem:[%s231 + $0xc8] sm:$0xff]
        %v732 = vld [vmem:[%s231 + $0xd8] sm:$0xff]
        %v733 = vld [vmem:[%s231 + $0xe0] sm:$0xff]
        %v734 = vld [vmem:[%s231 + $0xf0] sm:$0xff]
        %v735 = vld [vmem:[%s231 + $0xf8] sm:$0xff]
        %v736 = vld [vmem:[%s231 + $0x108] sm:$0xff]
        %v737 = vld [vmem:[%s231 + $0x110] sm:$0xff]
        %v738 = vld [vmem:[%s231 + $0x120] sm:$0xff]
        %v739 = vld [vmem:[%s231 + $0x128] sm:$0xff]
        %v740 = vld [vmem:[%s231 + $0x138] sm:$0xff]
        %v741 = vld [vmem:[%s231 + $0x140] sm:$0xff]
        %v742 = vld [vmem:[%s231 + $0x150] sm:$0xff]
        %v743 = vld [vmem:[%s231 + $0x158] sm:$0xff]
        %v744 = vld [vmem:[%s231 + $0x168] sm:$0xff]
        %v745 = vld [vmem:[%s231 + $0x170] sm:$0xff]
        %778 = vrot.lane.b32.xlu0 %v714, 12
        %v779 = vpop.permute.xlu0 %778
        %780 = vrot.lane.b32.xlu0 %v715, 12
        %v781 = vpop.permute.xlu0 %780
        %782 = vrot.lane.b32.xlu0 %v716, 12
        %v783 = vpop.permute.xlu0 %782
        %784 = vrot.lane.b32.xlu0 %v717, 12
        %v785 = vpop.permute.xlu0 %784
        %786 = vrot.lane.b32.xlu0 %v718, 12
        %v787 = vpop.permute.xlu0 %786
        %788 = vrot.lane.b32.xlu0 %v719, 12
        %v789 = vpop.permute.xlu0 %788
        %790 = vrot.lane.b32.xlu0 %v720, 12
        %v791 = vpop.permute.xlu0 %790
        %792 = vrot.lane.b32.xlu0 %v721, 12
        %v793 = vpop.permute.xlu0 %792
        %794 = vrot.lane.b32.xlu0 %v722, 12
        %v795 = vpop.permute.xlu0 %794
        %796 = vrot.lane.b32.xlu0 %v723, 12
        %v797 = vpop.permute.xlu0 %796
        %798 = vrot.lane.b32.xlu0 %v724, 12
        %v799 = vpop.permute.xlu0 %798
        %800 = vrot.lane.b32.xlu0 %v725, 12
        %v801 = vpop.permute.xlu0 %800
        %802 = vrot.lane.b32.xlu0 %v726, 12
        %v803 = vpop.permute.xlu0 %802
        %804 = vrot.lane.b32.xlu0 %v727, 12
        %v805 = vpop.permute.xlu0 %804
        %806 = vrot.lane.b32.xlu0 %v728, 12
        %v807 = vpop.permute.xlu0 %806
        %808 = vrot.lane.b32.xlu0 %v729, 12
        %v809 = vpop.permute.xlu0 %808
        %810 = vrot.lane.b32.xlu0 %v730, 12
        %v811 = vpop.permute.xlu0 %810
        %812 = vrot.lane.b32.xlu0 %v731, 12
        %v813 = vpop.permute.xlu0 %812
        %814 = vrot.lane.b32.xlu0 %v732, 12
        %v815 = vpop.permute.xlu0 %814
        %816 = vrot.lane.b32.xlu0 %v733, 12
        %v817 = vpop.permute.xlu0 %816
        %818 = vrot.lane.b32.xlu0 %v734, 12
        %v819 = vpop.permute.xlu0 %818
        %820 = vrot.lane.b32.xlu0 %v735, 12
        %v821 = vpop.permute.xlu0 %820
        %822 = vrot.lane.b32.xlu0 %v736, 12
        %v823 = vpop.permute.xlu0 %822
        %824 = vrot.lane.b32.xlu0 %v737, 12
        %v825 = vpop.permute.xlu0 %824
        %826 = vrot.lane.b32.xlu0 %v738, 12
        %v827 = vpop.permute.xlu0 %826
        %828 = vrot.lane.b32.xlu0 %v739, 12
        %v829 = vpop.permute.xlu0 %828
        %830 = vrot.lane.b32.xlu0 %v740, 12
        %v831 = vpop.permute.xlu0 %830
        %832 = vrot.lane.b32.xlu0 %v741, 12
        %v833 = vpop.permute.xlu0 %832
        %834 = vrot.lane.b32.xlu0 %v742, 12
        %v835 = vpop.permute.xlu0 %834
        %836 = vrot.lane.b32.xlu0 %v743, 12
        %v837 = vpop.permute.xlu0 %836
        %838 = vrot.lane.b32.xlu0 %v744, 12
        %v839 = vpop.permute.xlu0 %838
        %840 = vrot.lane.b32.xlu0 %v745, 12
        %v841 = vpop.permute.xlu0 %840
        %vm874 = vcmask 130144
        %875 = vst.msk [vmem:[#allocation3] sm:$0xff] %vm874, %v779
        %876 = vst.msk [vmem:[#allocation3 + $0x8] sm:$0xff] %vm874, %v781
        %877 = vst.msk [vmem:[#allocation3 + $0x10] sm:$0xff] %vm874, %v783
        %878 = vst.msk [vmem:[#allocation3 + $0x18] sm:$0xff] %vm874, %v785
        %879 = vst.msk [vmem:[#allocation3 + $0x20] sm:$0xff] %vm874, %v787
        %880 = vst.msk [vmem:[#allocation3 + $0x28] sm:$0xff] %vm874, %v789
        %881 = vst.msk [vmem:[#allocation3 + $0x30] sm:$0xff] %vm874, %v791
        %882 = vst.msk [vmem:[#allocation3 + $0x38] sm:$0xff] %vm874, %v793
        %883 = vst.msk [vmem:[#allocation3 + $0x40] sm:$0xff] %vm874, %v795
        %884 = vst.msk [vmem:[#allocation3 + $0x48] sm:$0xff] %vm874, %v797
        %885 = vst.msk [vmem:[#allocation3 + $0x50] sm:$0xff] %vm874, %v799
        %886 = vst.msk [vmem:[#allocation3 + $0x58] sm:$0xff] %vm874, %v801
        %887 = vst.msk [vmem:[#allocation3 + $0x60] sm:$0xff] %vm874, %v803
        %888 = vst.msk [vmem:[#allocation3 + $0x68] sm:$0xff] %vm874, %v805
        %889 = vst.msk [vmem:[#allocation3 + $0x70] sm:$0xff] %vm874, %v807
        %890 = vst.msk [vmem:[#allocation3 + $0x78] sm:$0xff] %vm874, %v809
        %891 = vst.msk [vmem:[#allocation3 + $0x80] sm:$0xff] %vm874, %v811
        %892 = vst.msk [vmem:[#allocation3 + $0x88] sm:$0xff] %vm874, %v813
        %893 = vst.msk [vmem:[#allocation3 + $0x90] sm:$0xff] %vm874, %v815
        %894 = vst.msk [vmem:[#allocation3 + $0x98] sm:$0xff] %vm874, %v817
        %895 = vst.msk [vmem:[#allocation3 + $0xa0] sm:$0xff] %vm874, %v819
        %896 = vst.msk [vmem:[#allocation3 + $0xa8] sm:$0xff] %vm874, %v821
        %897 = vst.msk [vmem:[#allocation3 + $0xb0] sm:$0xff] %vm874, %v823
        %898 = vst.msk [vmem:[#allocation3 + $0xb8] sm:$0xff] %vm874, %v825
        %899 = vst.msk [vmem:[#allocation3 + $0xc0] sm:$0xff] %vm874, %v827
        %900 = vst.msk [vmem:[#allocation3 + $0xc8] sm:$0xff] %vm874, %v829
        %901 = vst.msk [vmem:[#allocation3 + $0xd0] sm:$0xff] %vm874, %v831
        %902 = vst.msk [vmem:[#allocation3 + $0xd8] sm:$0xff] %vm874, %v833
        %903 = vst.msk [vmem:[#allocation3 + $0xe0] sm:$0xff] %vm874, %v835
        %904 = vst.msk [vmem:[#allocation3 + $0xe8] sm:$0xff] %vm874, %v837
        %905 = vst.msk [vmem:[#allocation3 + $0xf0] sm:$0xff] %vm874, %v839
        %906 = vst.msk [vmem:[#allocation3 + $0xf8] sm:$0xff] %vm874, %v841
        %v907 = vld [vmem:[%s231 + $0x1] sm:$0xff]
        %v908 = vld [vmem:[%s231 + $0x9] sm:$0xff]
        %v909 = vld [vmem:[%s231 + $0x19] sm:$0xff]
        %v910 = vld [vmem:[%s231 + $0x21] sm:$0xff]
        %v911 = vld [vmem:[%s231 + $0x31] sm:$0xff]
        %v912 = vld [vmem:[%s231 + $0x39] sm:$0xff]
        %v913 = vld [vmem:[%s231 + $0x49] sm:$0xff]
        %v914 = vld [vmem:[%s231 + $0x51] sm:$0xff]
        %v915 = vld [vmem:[%s231 + $0x61] sm:$0xff]
        %v916 = vld [vmem:[%s231 + $0x69] sm:$0xff]
        %v917 = vld [vmem:[%s231 + $0x79] sm:$0xff]
        %v918 = vld [vmem:[%s231 + $0x81] sm:$0xff]
        %v919 = vld [vmem:[%s231 + $0x91] sm:$0xff]
        %v920 = vld [vmem:[%s231 + $0x99] sm:$0xff]
        %v921 = vld [vmem:[%s231 + $0xa9] sm:$0xff]
        %v922 = vld [vmem:[%s231 + $0xb1] sm:$0xff]
        %v923 = vld [vmem:[%s231 + $0xc1] sm:$0xff]
        %v924 = vld [vmem:[%s231 + $0xc9] sm:$0xff]
        %v925 = vld [vmem:[%s231 + $0xd9] sm:$0xff]
        %v926 = vld [vmem:[%s231 + $0xe1] sm:$0xff]
        %v927 = vld [vmem:[%s231 + $0xf1] sm:$0xff]
        %v928 = vld [vmem:[%s231 + $0xf9] sm:$0xff]
        %v929 = vld [vmem:[%s231 + $0x109] sm:$0xff]
        %v930 = vld [vmem:[%s231 + $0x111] sm:$0xff]
        %v931 = vld [vmem:[%s231 + $0x121] sm:$0xff]
        %v932 = vld [vmem:[%s231 + $0x129] sm:$0xff]
        %v933 = vld [vmem:[%s231 + $0x139] sm:$0xff]
        %v934 = vld [vmem:[%s231 + $0x141] sm:$0xff]
        %v935 = vld [vmem:[%s231 + $0x151] sm:$0xff]
        %v936 = vld [vmem:[%s231 + $0x159] sm:$0xff]
        %v937 = vld [vmem:[%s231 + $0x169] sm:$0xff]
        %v938 = vld [vmem:[%s231 + $0x171] sm:$0xff]
        %971 = vrot.lane.b32.xlu0 %v907, 16
        %v972 = vpop.permute.xlu0 %971
        %973 = vrot.lane.b32.xlu0 %v908, 16
        %v974 = vpop.permute.xlu0 %973
        %975 = vrot.lane.b32.xlu0 %v909, 16
        %v976 = vpop.permute.xlu0 %975
        %977 = vrot.lane.b32.xlu0 %v910, 16
        %v978 = vpop.permute.xlu0 %977
        %979 = vrot.lane.b32.xlu0 %v911, 16
        %v980 = vpop.permute.xlu0 %979
        %981 = vrot.lane.b32.xlu0 %v912, 16
        %v982 = vpop.permute.xlu0 %981
        %983 = vrot.lane.b32.xlu0 %v913, 16
        %v984 = vpop.permute.xlu0 %983
        %985 = vrot.lane.b32.xlu0 %v914, 16
        %v986 = vpop.permute.xlu0 %985
        %987 = vrot.lane.b32.xlu0 %v915, 16
        %v988 = vpop.permute.xlu0 %987
        %989 = vrot.lane.b32.xlu0 %v916, 16
        %v990 = vpop.permute.xlu0 %989
        %991 = vrot.lane.b32.xlu0 %v917, 16
        %v992 = vpop.permute.xlu0 %991
        %993 = vrot.lane.b32.xlu0 %v918, 16
        %v994 = vpop.permute.xlu0 %993
        %995 = vrot.lane.b32.xlu0 %v919, 16
        %v996 = vpop.permute.xlu0 %995
        %997 = vrot.lane.b32.xlu0 %v920, 16
        %v998 = vpop.permute.xlu0 %997
        %999 = vrot.lane.b32.xlu0 %v921, 16
        %v1000 = vpop.permute.xlu0 %999
        %1001 = vrot.lane.b32.xlu0 %v922, 16
        %v1002 = vpop.permute.xlu0 %1001
        %1003 = vrot.lane.b32.xlu0 %v923, 16
        %v1004 = vpop.permute.xlu0 %1003
        %1005 = vrot.lane.b32.xlu0 %v924, 16
        %v1006 = vpop.permute.xlu0 %1005
        %1007 = vrot.lane.b32.xlu0 %v925, 16
        %v1008 = vpop.permute.xlu0 %1007
        %1009 = vrot.lane.b32.xlu0 %v926, 16
        %v1010 = vpop.permute.xlu0 %1009
        %1011 = vrot.lane.b32.xlu0 %v927, 16
        %v1012 = vpop.permute.xlu0 %1011
        %1013 = vrot.lane.b32.xlu0 %v928, 16
        %v1014 = vpop.permute.xlu0 %1013
        %1015 = vrot.lane.b32.xlu0 %v929, 16
        %v1016 = vpop.permute.xlu0 %1015
        %1017 = vrot.lane.b32.xlu0 %v930, 16
        %v1018 = vpop.permute.xlu0 %1017
        %1019 = vrot.lane.b32.xlu0 %v931, 16
        %v1020 = vpop.permute.xlu0 %1019
        %1021 = vrot.lane.b32.xlu0 %v932, 16
        %v1022 = vpop.permute.xlu0 %1021
        %1023 = vrot.lane.b32.xlu0 %v933, 16
        %v1024 = vpop.permute.xlu0 %1023
        %1025 = vrot.lane.b32.xlu0 %v934, 16
        %v1026 = vpop.permute.xlu0 %1025
        %1027 = vrot.lane.b32.xlu0 %v935, 16
        %v1028 = vpop.permute.xlu0 %1027
        %1029 = vrot.lane.b32.xlu0 %v936, 16
        %v1030 = vpop.permute.xlu0 %1029
        %1031 = vrot.lane.b32.xlu0 %v937, 16
        %v1032 = vpop.permute.xlu0 %1031
        %1033 = vrot.lane.b32.xlu0 %v938, 16
        %v1034 = vpop.permute.xlu0 %1033
        %vm1067 = vcmask 162944
        %1068 = vst.msk [vmem:[#allocation3] sm:$0xff] %vm1067, %v972
        %1069 = vst.msk [vmem:[#allocation3 + $0x8] sm:$0xff] %vm1067, %v974
        %1070 = vst.msk [vmem:[#allocation3 + $0x10] sm:$0xff] %vm1067, %v976
        %1071 = vst.msk [vmem:[#allocation3 + $0x18] sm:$0xff] %vm1067, %v978
        %1072 = vst.msk [vmem:[#allocation3 + $0x20] sm:$0xff] %vm1067, %v980
        %1073 = vst.msk [vmem:[#allocation3 + $0x28] sm:$0xff] %vm1067, %v982
        %1074 = vst.msk [vmem:[#allocation3 + $0x30] sm:$0xff] %vm1067, %v984
        %1075 = vst.msk [vmem:[#allocation3 + $0x38] sm:$0xff] %vm1067, %v986
        %1076 = vst.msk [vmem:[#allocation3 + $0x40] sm:$0xff] %vm1067, %v988
        %1077 = vst.msk [vmem:[#allocation3 + $0x48] sm:$0xff] %vm1067, %v990
        %1078 = vst.msk [vmem:[#allocation3 + $0x50] sm:$0xff] %vm1067, %v992
        %1079 = vst.msk [vmem:[#allocation3 + $0x58] sm:$0xff] %vm1067, %v994
        %1080 = vst.msk [vmem:[#allocation3 + $0x60] sm:$0xff] %vm1067, %v996
        %1081 = vst.msk [vmem:[#allocation3 + $0x68] sm:$0xff] %vm1067, %v998
        %1082 = vst.msk [vmem:[#allocation3 + $0x70] sm:$0xff] %vm1067, %v1000
        %1083 = vst.msk [vmem:[#allocation3 + $0x78] sm:$0xff] %vm1067, %v1002
        %1084 = vst.msk [vmem:[#allocation3 + $0x80] sm:$0xff] %vm1067, %v1004
        %1085 = vst.msk [vmem:[#allocation3 + $0x88] sm:$0xff] %vm1067, %v1006
        %1086 = vst.msk [vmem:[#allocation3 + $0x90] sm:$0xff] %vm1067, %v1008
        %1087 = vst.msk [vmem:[#allocation3 + $0x98] sm:$0xff] %vm1067, %v1010
        %1088 = vst.msk [vmem:[#allocation3 + $0xa0] sm:$0xff] %vm1067, %v1012
        %1089 = vst.msk [vmem:[#allocation3 + $0xa8] sm:$0xff] %vm1067, %v1014
        %1090 = vst.msk [vmem:[#allocation3 + $0xb0] sm:$0xff] %vm1067, %v1016
        %1091 = vst.msk [vmem:[#allocation3 + $0xb8] sm:$0xff] %vm1067, %v1018
        %1092 = vst.msk [vmem:[#allocation3 + $0xc0] sm:$0xff] %vm1067, %v1020
        %1093 = vst.msk [vmem:[#allocation3 + $0xc8] sm:$0xff] %vm1067, %v1022
        %1094 = vst.msk [vmem:[#allocation3 + $0xd0] sm:$0xff] %vm1067, %v1024
        %1095 = vst.msk [vmem:[#allocation3 + $0xd8] sm:$0xff] %vm1067, %v1026
        %1096 = vst.msk [vmem:[#allocation3 + $0xe0] sm:$0xff] %vm1067, %v1028
        %1097 = vst.msk [vmem:[#allocation3 + $0xe8] sm:$0xff] %vm1067, %v1030
        %1098 = vst.msk [vmem:[#allocation3 + $0xf0] sm:$0xff] %vm1067, %v1032
        %1099 = vst.msk [vmem:[#allocation3 + $0xf8] sm:$0xff] %vm1067, %v1034
        %v1100 = vld [vmem:[%s231 + $0x2] sm:$0xff]
        %v1101 = vld [vmem:[%s231 + $0xa] sm:$0xff]
        %v1102 = vld [vmem:[%s231 + $0x1a] sm:$0xff]
        %v1103 = vld [vmem:[%s231 + $0x22] sm:$0xff]
        %v1104 = vld [vmem:[%s231 + $0x32] sm:$0xff]
        %v1105 = vld [vmem:[%s231 + $0x3a] sm:$0xff]
        %v1106 = vld [vmem:[%s231 + $0x4a] sm:$0xff]
        %v1107 = vld [vmem:[%s231 + $0x52] sm:$0xff]
        %v1108 = vld [vmem:[%s231 + $0x62] sm:$0xff]
        %v1109 = vld [vmem:[%s231 + $0x6a] sm:$0xff]
        %v1110 = vld [vmem:[%s231 + $0x7a] sm:$0xff]
        %v1111 = vld [vmem:[%s231 + $0x82] sm:$0xff]
        %v1112 = vld [vmem:[%s231 + $0x92] sm:$0xff]
        %v1113 = vld [vmem:[%s231 + $0x9a] sm:$0xff]
        %v1114 = vld [vmem:[%s231 + $0xaa] sm:$0xff]
        %v1115 = vld [vmem:[%s231 + $0xb2] sm:$0xff]
        %v1116 = vld [vmem:[%s231 + $0xc2] sm:$0xff]
        %v1117 = vld [vmem:[%s231 + $0xca] sm:$0xff]
        %v1118 = vld [vmem:[%s231 + $0xda] sm:$0xff]
        %v1119 = vld [vmem:[%s231 + $0xe2] sm:$0xff]
        %v1120 = vld [vmem:[%s231 + $0xf2] sm:$0xff]
        %v1121 = vld [vmem:[%s231 + $0xfa] sm:$0xff]
        %v1122 = vld [vmem:[%s231 + $0x10a] sm:$0xff]
        %v1123 = vld [vmem:[%s231 + $0x112] sm:$0xff]
        %v1124 = vld [vmem:[%s231 + $0x122] sm:$0xff]
        %v1125 = vld [vmem:[%s231 + $0x12a] sm:$0xff]
        %v1126 = vld [vmem:[%s231 + $0x13a] sm:$0xff]
        %v1127 = vld [vmem:[%s231 + $0x142] sm:$0xff]
        %v1128 = vld [vmem:[%s231 + $0x152] sm:$0xff]
        %v1129 = vld [vmem:[%s231 + $0x15a] sm:$0xff]
        %v1130 = vld [vmem:[%s231 + $0x16a] sm:$0xff]
        %v1131 = vld [vmem:[%s231 + $0x172] sm:$0xff]
        %1164 = vrot.lane.b32.xlu0 %v1100, 20
        %v1165 = vpop.permute.xlu0 %1164
        %1166 = vrot.lane.b32.xlu0 %v1101, 20
        %v1167 = vpop.permute.xlu0 %1166
        %1168 = vrot.lane.b32.xlu0 %v1102, 20
        %v1169 = vpop.permute.xlu0 %1168
        %1170 = vrot.lane.b32.xlu0 %v1103, 20
        %v1171 = vpop.permute.xlu0 %1170
        %1172 = vrot.lane.b32.xlu0 %v1104, 20
        %v1173 = vpop.permute.xlu0 %1172
        %1174 = vrot.lane.b32.xlu0 %v1105, 20
        %v1175 = vpop.permute.xlu0 %1174
        %1176 = vrot.lane.b32.xlu0 %v1106, 20
        %v1177 = vpop.permute.xlu0 %1176
        %1178 = vrot.lane.b32.xlu0 %v1107, 20
        %v1179 = vpop.permute.xlu0 %1178
        %1180 = vrot.lane.b32.xlu0 %v1108, 20
        %v1181 = vpop.permute.xlu0 %1180
        %1182 = vrot.lane.b32.xlu0 %v1109, 20
        %v1183 = vpop.permute.xlu0 %1182
        %1184 = vrot.lane.b32.xlu0 %v1110, 20
        %v1185 = vpop.permute.xlu0 %1184
        %1186 = vrot.lane.b32.xlu0 %v1111, 20
        %v1187 = vpop.permute.xlu0 %1186
        %1188 = vrot.lane.b32.xlu0 %v1112, 20
        %v1189 = vpop.permute.xlu0 %1188
        %1190 = vrot.lane.b32.xlu0 %v1113, 20
        %v1191 = vpop.permute.xlu0 %1190
        %1192 = vrot.lane.b32.xlu0 %v1114, 20
        %v1193 = vpop.permute.xlu0 %1192
        %1194 = vrot.lane.b32.xlu0 %v1115, 20
        %v1195 = vpop.permute.xlu0 %1194
        %1196 = vrot.lane.b32.xlu0 %v1116, 20
        %v1197 = vpop.permute.xlu0 %1196
        %1198 = vrot.lane.b32.xlu0 %v1117, 20
        %v1199 = vpop.permute.xlu0 %1198
        %1200 = vrot.lane.b32.xlu0 %v1118, 20
        %v1201 = vpop.permute.xlu0 %1200
        %1202 = vrot.lane.b32.xlu0 %v1119, 20
        %v1203 = vpop.permute.xlu0 %1202
        %1204 = vrot.lane.b32.xlu0 %v1120, 20
        %v1205 = vpop.permute.xlu0 %1204
        %1206 = vrot.lane.b32.xlu0 %v1121, 20
        %v1207 = vpop.permute.xlu0 %1206
        %1208 = vrot.lane.b32.xlu0 %v1122, 20
        %v1209 = vpop.permute.xlu0 %1208
        %1210 = vrot.lane.b32.xlu0 %v1123, 20
        %v1211 = vpop.permute.xlu0 %1210
        %1212 = vrot.lane.b32.xlu0 %v1124, 20
        %v1213 = vpop.permute.xlu0 %1212
        %1214 = vrot.lane.b32.xlu0 %v1125, 20
        %v1215 = vpop.permute.xlu0 %1214
        %1216 = vrot.lane.b32.xlu0 %v1126, 20
        %v1217 = vpop.permute.xlu0 %1216
        %1218 = vrot.lane.b32.xlu0 %v1127, 20
        %v1219 = vpop.permute.xlu0 %1218
        %1220 = vrot.lane.b32.xlu0 %v1128, 20
        %v1221 = vpop.permute.xlu0 %1220
        %1222 = vrot.lane.b32.xlu0 %v1129, 20
        %v1223 = vpop.permute.xlu0 %1222
        %1224 = vrot.lane.b32.xlu0 %v1130, 20
        %v1225 = vpop.permute.xlu0 %1224
        %1226 = vrot.lane.b32.xlu0 %v1131, 20
        %v1227 = vpop.permute.xlu0 %1226
        %vm1260 = vcmask 195744
        %1261 = vst.msk [vmem:[#allocation3] sm:$0xff] %vm1260, %v1165
        %1262 = vst.msk [vmem:[#allocation3 + $0x8] sm:$0xff] %vm1260, %v1167
        %1263 = vst.msk [vmem:[#allocation3 + $0x10] sm:$0xff] %vm1260, %v1169
        %1264 = vst.msk [vmem:[#allocation3 + $0x18] sm:$0xff] %vm1260, %v1171
        %1265 = vst.msk [vmem:[#allocation3 + $0x20] sm:$0xff] %vm1260, %v1173
        %1266 = vst.msk [vmem:[#allocation3 + $0x28] sm:$0xff] %vm1260, %v1175
        %1267 = vst.msk [vmem:[#allocation3 + $0x30] sm:$0xff] %vm1260, %v1177
        %1268 = vst.msk [vmem:[#allocation3 + $0x38] sm:$0xff] %vm1260, %v1179
        %1269 = vst.msk [vmem:[#allocation3 + $0x40] sm:$0xff] %vm1260, %v1181
        %1270 = vst.msk [vmem:[#allocation3 + $0x48] sm:$0xff] %vm1260, %v1183
        %1271 = vst.msk [vmem:[#allocation3 + $0x50] sm:$0xff] %vm1260, %v1185
        %1272 = vst.msk [vmem:[#allocation3 + $0x58] sm:$0xff] %vm1260, %v1187
        %1273 = vst.msk [vmem:[#allocation3 + $0x60] sm:$0xff] %vm1260, %v1189
        %1274 = vst.msk [vmem:[#allocation3 + $0x68] sm:$0xff] %vm1260, %v1191
        %1275 = vst.msk [vmem:[#allocation3 + $0x70] sm:$0xff] %vm1260, %v1193
        %1276 = vst.msk [vmem:[#allocation3 + $0x78] sm:$0xff] %vm1260, %v1195
        %1277 = vst.msk [vmem:[#allocation3 + $0x80] sm:$0xff] %vm1260, %v1197
        %1278 = vst.msk [vmem:[#allocation3 + $0x88] sm:$0xff] %vm1260, %v1199
        %1279 = vst.msk [vmem:[#allocation3 + $0x90] sm:$0xff] %vm1260, %v1201
        %1280 = vst.msk [vmem:[#allocation3 + $0x98] sm:$0xff] %vm1260, %v1203
        %1281 = vst.msk [vmem:[#allocation3 + $0xa0] sm:$0xff] %vm1260, %v1205
        %1282 = vst.msk [vmem:[#allocation3 + $0xa8] sm:$0xff] %vm1260, %v1207
        %1283 = vst.msk [vmem:[#allocation3 + $0xb0] sm:$0xff] %vm1260, %v1209
        %1284 = vst.msk [vmem:[#allocation3 + $0xb8] sm:$0xff] %vm1260, %v1211
        %1285 = vst.msk [vmem:[#allocation3 + $0xc0] sm:$0xff] %vm1260, %v1213
        %1286 = vst.msk [vmem:[#allocation3 + $0xc8] sm:$0xff] %vm1260, %v1215
        %1287 = vst.msk [vmem:[#allocation3 + $0xd0] sm:$0xff] %vm1260, %v1217
        %1288 = vst.msk [vmem:[#allocation3 + $0xd8] sm:$0xff] %vm1260, %v1219
        %1289 = vst.msk [vmem:[#allocation3 + $0xe0] sm:$0xff] %vm1260, %v1221
        %1290 = vst.msk [vmem:[#allocation3 + $0xe8] sm:$0xff] %vm1260, %v1223
        %1291 = vst.msk [vmem:[#allocation3 + $0xf0] sm:$0xff] %vm1260, %v1225
        %1292 = vst.msk [vmem:[#allocation3 + $0xf8] sm:$0xff] %vm1260, %v1227
        %s1293 = scalar_lea.vmem [#allocation2], 48
        %v1294 = vld [vmem:[%s1293] sm:$0xff]
        %v1295 = vld [vmem:[%s1293 + $0x8] sm:$0xff]
        %v1296 = vld [vmem:[%s1293 + $0x18] sm:$0xff]
        %v1297 = vld [vmem:[%s1293 + $0x20] sm:$0xff]
        %v1298 = vld [vmem:[%s1293 + $0x30] sm:$0xff]
        %v1299 = vld [vmem:[%s1293 + $0x38] sm:$0xff]
        %v1300 = vld [vmem:[%s1293 + $0x48] sm:$0xff]
        %v1301 = vld [vmem:[%s1293 + $0x50] sm:$0xff]
        %v1302 = vld [vmem:[%s1293 + $0x60] sm:$0xff]
        %v1303 = vld [vmem:[%s1293 + $0x68] sm:$0xff]
        %v1304 = vld [vmem:[%s1293 + $0x78] sm:$0xff]
        %v1305 = vld [vmem:[%s1293 + $0x80] sm:$0xff]
        %v1306 = vld [vmem:[%s1293 + $0x90] sm:$0xff]
        %v1307 = vld [vmem:[%s1293 + $0x98] sm:$0xff]
        %v1308 = vld [vmem:[%s1293 + $0xa8] sm:$0xff]
        %v1309 = vld [vmem:[%s1293 + $0xb0] sm:$0xff]
        %v1310 = vld [vmem:[%s1293 + $0xc0] sm:$0xff]
        %v1311 = vld [vmem:[%s1293 + $0xc8] sm:$0xff]
        %v1312 = vld [vmem:[%s1293 + $0xd8] sm:$0xff]
        %v1313 = vld [vmem:[%s1293 + $0xe0] sm:$0xff]
        %v1314 = vld [vmem:[%s1293 + $0xf0] sm:$0xff]
        %v1315 = vld [vmem:[%s1293 + $0xf8] sm:$0xff]
        %v1316 = vld [vmem:[%s1293 + $0x108] sm:$0xff]
        %v1317 = vld [vmem:[%s1293 + $0x110] sm:$0xff]
        %v1318 = vld [vmem:[%s1293 + $0x120] sm:$0xff]
        %v1319 = vld [vmem:[%s1293 + $0x128] sm:$0xff]
        %v1320 = vld [vmem:[%s1293 + $0x138] sm:$0xff]
        %v1321 = vld [vmem:[%s1293 + $0x140] sm:$0xff]
        %v1322 = vld [vmem:[%s1293 + $0x150] sm:$0xff]
        %v1323 = vld [vmem:[%s1293 + $0x158] sm:$0xff]
        %v1324 = vld [vmem:[%s1293 + $0x168] sm:$0xff]
        %v1325 = vld [vmem:[%s1293 + $0x170] sm:$0xff]
        %1358 = vrot.lane.b32.xlu0 %v1294, 24
        %v1359 = vpop.permute.xlu0 %1358
        %1360 = vrot.lane.b32.xlu0 %v1295, 24
        %v1361 = vpop.permute.xlu0 %1360
        %1362 = vrot.lane.b32.xlu0 %v1296, 24
        %v1363 = vpop.permute.xlu0 %1362
        %1364 = vrot.lane.b32.xlu0 %v1297, 24
        %v1365 = vpop.permute.xlu0 %1364
        %1366 = vrot.lane.b32.xlu0 %v1298, 24
        %v1367 = vpop.permute.xlu0 %1366
        %1368 = vrot.lane.b32.xlu0 %v1299, 24
        %v1369 = vpop.permute.xlu0 %1368
        %1370 = vrot.lane.b32.xlu0 %v1300, 24
        %v1371 = vpop.permute.xlu0 %1370
        %1372 = vrot.lane.b32.xlu0 %v1301, 24
        %v1373 = vpop.permute.xlu0 %1372
        %1374 = vrot.lane.b32.xlu0 %v1302, 24
        %v1375 = vpop.permute.xlu0 %1374
        %1376 = vrot.lane.b32.xlu0 %v1303, 24
        %v1377 = vpop.permute.xlu0 %1376
        %1378 = vrot.lane.b32.xlu0 %v1304, 24
        %v1379 = vpop.permute.xlu0 %1378
        %1380 = vrot.lane.b32.xlu0 %v1305, 24
        %v1381 = vpop.permute.xlu0 %1380
        %1382 = vrot.lane.b32.xlu0 %v1306, 24
        %v1383 = vpop.permute.xlu0 %1382
        %1384 = vrot.lane.b32.xlu0 %v1307, 24
        %v1385 = vpop.permute.xlu0 %1384
        %1386 = vrot.lane.b32.xlu0 %v1308, 24
        %v1387 = vpop.permute.xlu0 %1386
        %1388 = vrot.lane.b32.xlu0 %v1309, 24
        %v1389 = vpop.permute.xlu0 %1388
        %1390 = vrot.lane.b32.xlu0 %v1310, 24
        %v1391 = vpop.permute.xlu0 %1390
        %1392 = vrot.lane.b32.xlu0 %v1311, 24
        %v1393 = vpop.permute.xlu0 %1392
        %1394 = vrot.lane.b32.xlu0 %v1312, 24
        %v1395 = vpop.permute.xlu0 %1394
        %1396 = vrot.lane.b32.xlu0 %v1313, 24
        %v1397 = vpop.permute.xlu0 %1396
        %1398 = vrot.lane.b32.xlu0 %v1314, 24
        %v1399 = vpop.permute.xlu0 %1398
        %1400 = vrot.lane.b32.xlu0 %v1315, 24
        %v1401 = vpop.permute.xlu0 %1400
        %1402 = vrot.lane.b32.xlu0 %v1316, 24
        %v1403 = vpop.permute.xlu0 %1402
        %1404 = vrot.lane.b32.xlu0 %v1317, 24
        %v1405 = vpop.permute.xlu0 %1404
        %1406 = vrot.lane.b32.xlu0 %v1318, 24
        %v1407 = vpop.permute.xlu0 %1406
        %1408 = vrot.lane.b32.xlu0 %v1319, 24
        %v1409 = vpop.permute.xlu0 %1408
        %1410 = vrot.lane.b32.xlu0 %v1320, 24
        %v1411 = vpop.permute.xlu0 %1410
        %1412 = vrot.lane.b32.xlu0 %v1321, 24
        %v1413 = vpop.permute.xlu0 %1412
        %1414 = vrot.lane.b32.xlu0 %v1322, 24
        %v1415 = vpop.permute.xlu0 %1414
        %1416 = vrot.lane.b32.xlu0 %v1323, 24
        %v1417 = vpop.permute.xlu0 %1416
        %1418 = vrot.lane.b32.xlu0 %v1324, 24
        %v1419 = vpop.permute.xlu0 %1418
        %1420 = vrot.lane.b32.xlu0 %v1325, 24
        %v1421 = vpop.permute.xlu0 %1420
        %vm1454 = vcmask 228544
        %1455 = vst.msk [vmem:[#allocation3] sm:$0xff] %vm1454, %v1359
        %1456 = vst.msk [vmem:[#allocation3 + $0x8] sm:$0xff] %vm1454, %v1361
        %1457 = vst.msk [vmem:[#allocation3 + $0x10] sm:$0xff] %vm1454, %v1363
        %1458 = vst.msk [vmem:[#allocation3 + $0x18] sm:$0xff] %vm1454, %v1365
        %1459 = vst.msk [vmem:[#allocation3 + $0x20] sm:$0xff] %vm1454, %v1367
        %1460 = vst.msk [vmem:[#allocation3 + $0x28] sm:$0xff] %vm1454, %v1369
        %1461 = vst.msk [vmem:[#allocation3 + $0x30] sm:$0xff] %vm1454, %v1371
        %1462 = vst.msk [vmem:[#allocation3 + $0x38] sm:$0xff] %vm1454, %v1373
        %1463 = vst.msk [vmem:[#allocation3 + $0x40] sm:$0xff] %vm1454, %v1375
        %1464 = vst.msk [vmem:[#allocation3 + $0x48] sm:$0xff] %vm1454, %v1377
        %1465 = vst.msk [vmem:[#allocation3 + $0x50] sm:$0xff] %vm1454, %v1379
        %1466 = vst.msk [vmem:[#allocation3 + $0x58] sm:$0xff] %vm1454, %v1381
        %1467 = vst.msk [vmem:[#allocation3 + $0x60] sm:$0xff] %vm1454, %v1383
        %1468 = vst.msk [vmem:[#allocation3 + $0x68] sm:$0xff] %vm1454, %v1385
        %1469 = vst.msk [vmem:[#allocation3 + $0x70] sm:$0xff] %vm1454, %v1387
        %1470 = vst.msk [vmem:[#allocation3 + $0x78] sm:$0xff] %vm1454, %v1389
        %1471 = vst.msk [vmem:[#allocation3 + $0x80] sm:$0xff] %vm1454, %v1391
        %1472 = vst.msk [vmem:[#allocation3 + $0x88] sm:$0xff] %vm1454, %v1393
        %1473 = vst.msk [vmem:[#allocation3 + $0x90] sm:$0xff] %vm1454, %v1395
        %1474 = vst.msk [vmem:[#allocation3 + $0x98] sm:$0xff] %vm1454, %v1397
        %1475 = vst.msk [vmem:[#allocation3 + $0xa0] sm:$0xff] %vm1454, %v1399
        %1476 = vst.msk [vmem:[#allocation3 + $0xa8] sm:$0xff] %vm1454, %v1401
        %1477 = vst.msk [vmem:[#allocation3 + $0xb0] sm:$0xff] %vm1454, %v1403
        %1478 = vst.msk [vmem:[#allocation3 + $0xb8] sm:$0xff] %vm1454, %v1405
        %1479 = vst.msk [vmem:[#allocation3 + $0xc0] sm:$0xff] %vm1454, %v1407
        %1480 = vst.msk [vmem:[#allocation3 + $0xc8] sm:$0xff] %vm1454, %v1409
        %1481 = vst.msk [vmem:[#allocation3 + $0xd0] sm:$0xff] %vm1454, %v1411
        %1482 = vst.msk [vmem:[#allocation3 + $0xd8] sm:$0xff] %vm1454, %v1413
        %1483 = vst.msk [vmem:[#allocation3 + $0xe0] sm:$0xff] %vm1454, %v1415
        %1484 = vst.msk [vmem:[#allocation3 + $0xe8] sm:$0xff] %vm1454, %v1417
        %1485 = vst.msk [vmem:[#allocation3 + $0xf0] sm:$0xff] %vm1454, %v1419
        %1486 = vst.msk [vmem:[#allocation3 + $0xf8] sm:$0xff] %vm1454, %v1421
        %v1487 = vld [vmem:[%s1293 + $0x1] sm:$0xff]
        %v1488 = vld [vmem:[%s1293 + $0x9] sm:$0xff]
        %v1489 = vld [vmem:[%s1293 + $0x19] sm:$0xff]
        %v1490 = vld [vmem:[%s1293 + $0x21] sm:$0xff]
        %v1491 = vld [vmem:[%s1293 + $0x31] sm:$0xff]
        %v1492 = vld [vmem:[%s1293 + $0x39] sm:$0xff]
        %v1493 = vld [vmem:[%s1293 + $0x49] sm:$0xff]
        %v1494 = vld [vmem:[%s1293 + $0x51] sm:$0xff]
        %v1495 = vld [vmem:[%s1293 + $0x61] sm:$0xff]
        %v1496 = vld [vmem:[%s1293 + $0x69] sm:$0xff]
        %v1497 = vld [vmem:[%s1293 + $0x79] sm:$0xff]
        %v1498 = vld [vmem:[%s1293 + $0x81] sm:$0xff]
        %v1499 = vld [vmem:[%s1293 + $0x91] sm:$0xff]
        %v1500 = vld [vmem:[%s1293 + $0x99] sm:$0xff]
        %v1501 = vld [vmem:[%s1293 + $0xa9] sm:$0xff]
        %v1502 = vld [vmem:[%s1293 + $0xb1] sm:$0xff]
        %v1503 = vld [vmem:[%s1293 + $0xc1] sm:$0xff]
        %v1504 = vld [vmem:[%s1293 + $0xc9] sm:$0xff]
        %v1505 = vld [vmem:[%s1293 + $0xd9] sm:$0xff]
        %v1506 = vld [vmem:[%s1293 + $0xe1] sm:$0xff]
        %v1507 = vld [vmem:[%s1293 + $0xf1] sm:$0xff]
        %v1508 = vld [vmem:[%s1293 + $0xf9] sm:$0xff]
        %v1509 = vld [vmem:[%s1293 + $0x109] sm:$0xff]
        %v1510 = vld [vmem:[%s1293 + $0x111] sm:$0xff]
        %v1511 = vld [vmem:[%s1293 + $0x121] sm:$0xff]
        %v1512 = vld [vmem:[%s1293 + $0x129] sm:$0xff]
        %v1513 = vld [vmem:[%s1293 + $0x139] sm:$0xff]
        %v1514 = vld [vmem:[%s1293 + $0x141] sm:$0xff]
        %v1515 = vld [vmem:[%s1293 + $0x151] sm:$0xff]
        %v1516 = vld [vmem:[%s1293 + $0x159] sm:$0xff]
        %v1517 = vld [vmem:[%s1293 + $0x169] sm:$0xff]
        %v1518 = vld [vmem:[%s1293 + $0x171] sm:$0xff]
        %1551 = vrot.lane.b32.xlu0 %v1487, 28
        %v1552 = vpop.permute.xlu0 %1551
        %1553 = vrot.lane.b32.xlu0 %v1488, 28
        %v1554 = vpop.permute.xlu0 %1553
        %1555 = vrot.lane.b32.xlu0 %v1489, 28
        %v1556 = vpop.permute.xlu0 %1555
        %1557 = vrot.lane.b32.xlu0 %v1490, 28
        %v1558 = vpop.permute.xlu0 %1557
        %1559 = vrot.lane.b32.xlu0 %v1491, 28
        %v1560 = vpop.permute.xlu0 %1559
        %1561 = vrot.lane.b32.xlu0 %v1492, 28
        %v1562 = vpop.permute.xlu0 %1561
        %1563 = vrot.lane.b32.xlu0 %v1493, 28
        %v1564 = vpop.permute.xlu0 %1563
        %1565 = vrot.lane.b32.xlu0 %v1494, 28
        %v1566 = vpop.permute.xlu0 %1565
        %1567 = vrot.lane.b32.xlu0 %v1495, 28
        %v1568 = vpop.permute.xlu0 %1567
        %1569 = vrot.lane.b32.xlu0 %v1496, 28
        %v1570 = vpop.permute.xlu0 %1569
        %1571 = vrot.lane.b32.xlu0 %v1497, 28
        %v1572 = vpop.permute.xlu0 %1571
        %1573 = vrot.lane.b32.xlu0 %v1498, 28
        %v1574 = vpop.permute.xlu0 %1573
        %1575 = vrot.lane.b32.xlu0 %v1499, 28
        %v1576 = vpop.permute.xlu0 %1575
        %1577 = vrot.lane.b32.xlu0 %v1500, 28
        %v1578 = vpop.permute.xlu0 %1577
        %1579 = vrot.lane.b32.xlu0 %v1501, 28
        %v1580 = vpop.permute.xlu0 %1579
        %1581 = vrot.lane.b32.xlu0 %v1502, 28
        %v1582 = vpop.permute.xlu0 %1581
        %1583 = vrot.lane.b32.xlu0 %v1503, 28
        %v1584 = vpop.permute.xlu0 %1583
        %1585 = vrot.lane.b32.xlu0 %v1504, 28
        %v1586 = vpop.permute.xlu0 %1585
        %1587 = vrot.lane.b32.xlu0 %v1505, 28
        %v1588 = vpop.permute.xlu0 %1587
        %1589 = vrot.lane.b32.xlu0 %v1506, 28
        %v1590 = vpop.permute.xlu0 %1589
        %1591 = vrot.lane.b32.xlu0 %v1507, 28
        %v1592 = vpop.permute.xlu0 %1591
        %1593 = vrot.lane.b32.xlu0 %v1508, 28
        %v1594 = vpop.permute.xlu0 %1593
        %1595 = vrot.lane.b32.xlu0 %v1509, 28
        %v1596 = vpop.permute.xlu0 %1595
        %1597 = vrot.lane.b32.xlu0 %v1510, 28
        %v1598 = vpop.permute.xlu0 %1597
        %1599 = vrot.lane.b32.xlu0 %v1511, 28
        %v1600 = vpop.permute.xlu0 %1599
        %1601 = vrot.lane.b32.xlu0 %v1512, 28
        %v1602 = vpop.permute.xlu0 %1601
        %1603 = vrot.lane.b32.xlu0 %v1513, 28
        %v1604 = vpop.permute.xlu0 %1603
        %1605 = vrot.lane.b32.xlu0 %v1514, 28
        %v1606 = vpop.permute.xlu0 %1605
        %1607 = vrot.lane.b32.xlu0 %v1515, 28
        %v1608 = vpop.permute.xlu0 %1607
        %1609 = vrot.lane.b32.xlu0 %v1516, 28
        %v1610 = vpop.permute.xlu0 %1609
        %1611 = vrot.lane.b32.xlu0 %v1517, 28
        %v1612 = vpop.permute.xlu0 %1611
        %1613 = vrot.lane.b32.xlu0 %v1518, 28
        %v1614 = vpop.permute.xlu0 %1613
        %vm1647 = vcmask 261344
        %1648 = vst.msk [vmem:[#allocation3] sm:$0xff] %vm1647, %v1552
        %1649 = vst.msk [vmem:[#allocation3 + $0x8] sm:$0xff] %vm1647, %v1554
        %1650 = vst.msk [vmem:[#allocation3 + $0x10] sm:$0xff] %vm1647, %v1556
        %1651 = vst.msk [vmem:[#allocation3 + $0x18] sm:$0xff] %vm1647, %v1558
        %1652 = vst.msk [vmem:[#allocation3 + $0x20] sm:$0xff] %vm1647, %v1560
        %1653 = vst.msk [vmem:[#allocation3 + $0x28] sm:$0xff] %vm1647, %v1562
        %1654 = vst.msk [vmem:[#allocation3 + $0x30] sm:$0xff] %vm1647, %v1564
        %1655 = vst.msk [vmem:[#allocation3 + $0x38] sm:$0xff] %vm1647, %v1566
        %1656 = vst.msk [vmem:[#allocation3 + $0x40] sm:$0xff] %vm1647, %v1568
        %1657 = vst.msk [vmem:[#allocation3 + $0x48] sm:$0xff] %vm1647, %v1570
        %1658 = vst.msk [vmem:[#allocation3 + $0x50] sm:$0xff] %vm1647, %v1572
        %1659 = vst.msk [vmem:[#allocation3 + $0x58] sm:$0xff] %vm1647, %v1574
        %1660 = vst.msk [vmem:[#allocation3 + $0x60] sm:$0xff] %vm1647, %v1576
        %1661 = vst.msk [vmem:[#allocation3 + $0x68] sm:$0xff] %vm1647, %v1578
        %1662 = vst.msk [vmem:[#allocation3 + $0x70] sm:$0xff] %vm1647, %v1580
        %1663 = vst.msk [vmem:[#allocation3 + $0x78] sm:$0xff] %vm1647, %v1582
        %1664 = vst.msk [vmem:[#allocation3 + $0x80] sm:$0xff] %vm1647, %v1584
        %1665 = vst.msk [vmem:[#allocation3 + $0x88] sm:$0xff] %vm1647, %v1586
        %1666 = vst.msk [vmem:[#allocation3 + $0x90] sm:$0xff] %vm1647, %v1588
        %1667 = vst.msk [vmem:[#allocation3 + $0x98] sm:$0xff] %vm1647, %v1590
        %1668 = vst.msk [vmem:[#allocation3 + $0xa0] sm:$0xff] %vm1647, %v1592
        %1669 = vst.msk [vmem:[#allocation3 + $0xa8] sm:$0xff] %vm1647, %v1594
        %1670 = vst.msk [vmem:[#allocation3 + $0xb0] sm:$0xff] %vm1647, %v1596
        %1671 = vst.msk [vmem:[#allocation3 + $0xb8] sm:$0xff] %vm1647, %v1598
        %1672 = vst.msk [vmem:[#allocation3 + $0xc0] sm:$0xff] %vm1647, %v1600
        %1673 = vst.msk [vmem:[#allocation3 + $0xc8] sm:$0xff] %vm1647, %v1602
        %1674 = vst.msk [vmem:[#allocation3 + $0xd0] sm:$0xff] %vm1647, %v1604
        %1675 = vst.msk [vmem:[#allocation3 + $0xd8] sm:$0xff] %vm1647, %v1606
        %1676 = vst.msk [vmem:[#allocation3 + $0xe0] sm:$0xff] %vm1647, %v1608
        %1677 = vst.msk [vmem:[#allocation3 + $0xe8] sm:$0xff] %vm1647, %v1610
        %1678 = vst.msk [vmem:[#allocation3 + $0xf0] sm:$0xff] %vm1647, %v1612
        %1679 = vst.msk [vmem:[#allocation3 + $0xf8] sm:$0xff] %vm1647, %v1614
        %v1680 = vld [vmem:[%s1293 + $0x2] sm:$0xff]
        %v1681 = vld [vmem:[%s1293 + $0xa] sm:$0xff]
        %v1682 = vld [vmem:[%s1293 + $0x1a] sm:$0xff]
        %v1683 = vld [vmem:[%s1293 + $0x22] sm:$0xff]
        %v1684 = vld [vmem:[%s1293 + $0x32] sm:$0xff]
        %v1685 = vld [vmem:[%s1293 + $0x3a] sm:$0xff]
        %v1686 = vld [vmem:[%s1293 + $0x4a] sm:$0xff]
        %v1687 = vld [vmem:[%s1293 + $0x52] sm:$0xff]
        %v1688 = vld [vmem:[%s1293 + $0x62] sm:$0xff]
        %v1689 = vld [vmem:[%s1293 + $0x6a] sm:$0xff]
        %v1690 = vld [vmem:[%s1293 + $0x7a] sm:$0xff]
        %v1691 = vld [vmem:[%s1293 + $0x82] sm:$0xff]
        %v1692 = vld [vmem:[%s1293 + $0x92] sm:$0xff]
        %v1693 = vld [vmem:[%s1293 + $0x9a] sm:$0xff]
        %v1694 = vld [vmem:[%s1293 + $0xaa] sm:$0xff]
        %v1695 = vld [vmem:[%s1293 + $0xb2] sm:$0xff]
        %v1696 = vld [vmem:[%s1293 + $0xc2] sm:$0xff]
        %v1697 = vld [vmem:[%s1293 + $0xca] sm:$0xff]
        %v1698 = vld [vmem:[%s1293 + $0xda] sm:$0xff]
        %v1699 = vld [vmem:[%s1293 + $0xe2] sm:$0xff]
        %v1700 = vld [vmem:[%s1293 + $0xf2] sm:$0xff]
        %v1701 = vld [vmem:[%s1293 + $0xfa] sm:$0xff]
        %v1702 = vld [vmem:[%s1293 + $0x10a] sm:$0xff]
        %v1703 = vld [vmem:[%s1293 + $0x112] sm:$0xff]
        %v1704 = vld [vmem:[%s1293 + $0x122] sm:$0xff]
        %v1705 = vld [vmem:[%s1293 + $0x12a] sm:$0xff]
        %v1706 = vld [vmem:[%s1293 + $0x13a] sm:$0xff]
        %v1707 = vld [vmem:[%s1293 + $0x142] sm:$0xff]
        %v1708 = vld [vmem:[%s1293 + $0x152] sm:$0xff]
        %v1709 = vld [vmem:[%s1293 + $0x15a] sm:$0xff]
        %v1710 = vld [vmem:[%s1293 + $0x16a] sm:$0xff]
        %v1711 = vld [vmem:[%s1293 + $0x172] sm:$0xff]
        %1744 = vrot.lane.b32.xlu0 %v1680, 32
        %v1745 = vpop.permute.xlu0 %1744
        %1746 = vrot.lane.b32.xlu0 %v1681, 32
        %v1747 = vpop.permute.xlu0 %1746
        %1748 = vrot.lane.b32.xlu0 %v1682, 32
        %v1749 = vpop.permute.xlu0 %1748
        %1750 = vrot.lane.b32.xlu0 %v1683, 32
        %v1751 = vpop.permute.xlu0 %1750
        %1752 = vrot.lane.b32.xlu0 %v1684, 32
        %v1753 = vpop.permute.xlu0 %1752
        %1754 = vrot.lane.b32.xlu0 %v1685, 32
        %v1755 = vpop.permute.xlu0 %1754
        %1756 = vrot.lane.b32.xlu0 %v1686, 32
        %v1757 = vpop.permute.xlu0 %1756
        %1758 = vrot.lane.b32.xlu0 %v1687, 32
        %v1759 = vpop.permute.xlu0 %1758
        %1760 = vrot.lane.b32.xlu0 %v1688, 32
        %v1761 = vpop.permute.xlu0 %1760
        %1762 = vrot.lane.b32.xlu0 %v1689, 32
        %v1763 = vpop.permute.xlu0 %1762
        %1764 = vrot.lane.b32.xlu0 %v1690, 32
        %v1765 = vpop.permute.xlu0 %1764
        %1766 = vrot.lane.b32.xlu0 %v1691, 32
        %v1767 = vpop.permute.xlu0 %1766
        %1768 = vrot.lane.b32.xlu0 %v1692, 32
        %v1769 = vpop.permute.xlu0 %1768
        %1770 = vrot.lane.b32.xlu0 %v1693, 32
        %v1771 = vpop.permute.xlu0 %1770
        %1772 = vrot.lane.b32.xlu0 %v1694, 32
        %v1773 = vpop.permute.xlu0 %1772
        %1774 = vrot.lane.b32.xlu0 %v1695, 32
        %v1775 = vpop.permute.xlu0 %1774
        %1776 = vrot.lane.b32.xlu0 %v1696, 32
        %v1777 = vpop.permute.xlu0 %1776
        %1778 = vrot.lane.b32.xlu0 %v1697, 32
        %v1779 = vpop.permute.xlu0 %1778
        %1780 = vrot.lane.b32.xlu0 %v1698, 32
        %v1781 = vpop.permute.xlu0 %1780
        %1782 = vrot.lane.b32.xlu0 %v1699, 32
        %v1783 = vpop.permute.xlu0 %1782
        %1784 = vrot.lane.b32.xlu0 %v1700, 32
        %v1785 = vpop.permute.xlu0 %1784
        %1786 = vrot.lane.b32.xlu0 %v1701, 32
        %v1787 = vpop.permute.xlu0 %1786
        %1788 = vrot.lane.b32.xlu0 %v1702, 32
        %v1789 = vpop.permute.xlu0 %1788
        %1790 = vrot.lane.b32.xlu0 %v1703, 32
        %v1791 = vpop.permute.xlu0 %1790
        %1792 = vrot.lane.b32.xlu0 %v1704, 32
        %v1793 = vpop.permute.xlu0 %1792
        %1794 = vrot.lane.b32.xlu0 %v1705, 32
        %v1795 = vpop.permute.xlu0 %1794
        %1796 = vrot.lane.b32.xlu0 %v1706, 32
        %v1797 = vpop.permute.xlu0 %1796
        %1798 = vrot.lane.b32.xlu0 %v1707, 32
        %v1799 = vpop.permute.xlu0 %1798
        %1800 = vrot.lane.b32.xlu0 %v1708, 32
        %v1801 = vpop.permute.xlu0 %1800
        %1802 = vrot.lane.b32.xlu0 %v1709, 32
        %v1803 = vpop.permute.xlu0 %1802
        %1804 = vrot.lane.b32.xlu0 %v1710, 32
        %v1805 = vpop.permute.xlu0 %1804
        %1806 = vrot.lane.b32.xlu0 %v1711, 32
        %v1807 = vpop.permute.xlu0 %1806
        %vm1840 = vcmask 294144
        %1841 = vst.msk [vmem:[#allocation3] sm:$0xff] %vm1840, %v1745
        %1842 = vst.msk [vmem:[#allocation3 + $0x8] sm:$0xff] %vm1840, %v1747
        %1843 = vst.msk [vmem:[#allocation3 + $0x10] sm:$0xff] %vm1840, %v1749
        %1844 = vst.msk [vmem:[#allocation3 + $0x18] sm:$0xff] %vm1840, %v1751
        %1845 = vst.msk [vmem:[#allocation3 + $0x20] sm:$0xff] %vm1840, %v1753
        %1846 = vst.msk [vmem:[#allocation3 + $0x28] sm:$0xff] %vm1840, %v1755
        %1847 = vst.msk [vmem:[#allocation3 + $0x30] sm:$0xff] %vm1840, %v1757
        %1848 = vst.msk [vmem:[#allocation3 + $0x38] sm:$0xff] %vm1840, %v1759
        %1849 = vst.msk [vmem:[#allocation3 + $0x40] sm:$0xff] %vm1840, %v1761
        %1850 = vst.msk [vmem:[#allocation3 + $0x48] sm:$0xff] %vm1840, %v1763
        %1851 = vst.msk [vmem:[#allocation3 + $0x50] sm:$0xff] %vm1840, %v1765
        %1852 = vst.msk [vmem:[#allocation3 + $0x58] sm:$0xff] %vm1840, %v1767
        %1853 = vst.msk [vmem:[#allocation3 + $0x60] sm:$0xff] %vm1840, %v1769
        %1854 = vst.msk [vmem:[#allocation3 + $0x68] sm:$0xff] %vm1840, %v1771
        %1855 = vst.msk [vmem:[#allocation3 + $0x70] sm:$0xff] %vm1840, %v1773
        %1856 = vst.msk [vmem:[#allocation3 + $0x78] sm:$0xff] %vm1840, %v1775
        %1857 = vst.msk [vmem:[#allocation3 + $0x80] sm:$0xff] %vm1840, %v1777
        %1858 = vst.msk [vmem:[#allocation3 + $0x88] sm:$0xff] %vm1840, %v1779
        %1859 = vst.msk [vmem:[#allocation3 + $0x90] sm:$0xff] %vm1840, %v1781
        %1860 = vst.msk [vmem:[#allocation3 + $0x98] sm:$0xff] %vm1840, %v1783
        %1861 = vst.msk [vmem:[#allocation3 + $0xa0] sm:$0xff] %vm1840, %v1785
        %1862 = vst.msk [vmem:[#allocation3 + $0xa8] sm:$0xff] %vm1840, %v1787
        %1863 = vst.msk [vmem:[#allocation3 + $0xb0] sm:$0xff] %vm1840, %v1789
        %1864 = vst.msk [vmem:[#allocation3 + $0xb8] sm:$0xff] %vm1840, %v1791
        %1865 = vst.msk [vmem:[#allocation3 + $0xc0] sm:$0xff] %vm1840, %v1793
        %1866 = vst.msk [vmem:[#allocation3 + $0xc8] sm:$0xff] %vm1840, %v1795
        %1867 = vst.msk [vmem:[#allocation3 + $0xd0] sm:$0xff] %vm1840, %v1797
        %1868 = vst.msk [vmem:[#allocation3 + $0xd8] sm:$0xff] %vm1840, %v1799
        %1869 = vst.msk [vmem:[#allocation3 + $0xe0] sm:$0xff] %vm1840, %v1801
        %1870 = vst.msk [vmem:[#allocation3 + $0xe8] sm:$0xff] %vm1840, %v1803
        %1871 = vst.msk [vmem:[#allocation3 + $0xf0] sm:$0xff] %vm1840, %v1805
        %1872 = vst.msk [vmem:[#allocation3 + $0xf8] sm:$0xff] %vm1840, %v1807
        %v1873 = vld [vmem:[#allocation3] sm:$0xff]
        %v1874 = vld [vmem:[#allocation3 + $0x8] sm:$0xff]
        %v1875 = vld [vmem:[#allocation3 + $0x10] sm:$0xff]
        %v1876 = vld [vmem:[#allocation3 + $0x18] sm:$0xff]
        %v1877 = vld [vmem:[#allocation3 + $0x20] sm:$0xff]
        %v1878 = vld [vmem:[#allocation3 + $0x28] sm:$0xff]
        %v1879 = vld [vmem:[#allocation3 + $0x30] sm:$0xff]
        %v1880 = vld [vmem:[#allocation3 + $0x38] sm:$0xff]
        %v1881 = vld [vmem:[#allocation3 + $0x40] sm:$0xff]
        %v1882 = vld [vmem:[#allocation3 + $0x48] sm:$0xff]
        %v1883 = vld [vmem:[#allocation3 + $0x50] sm:$0xff]
        %v1884 = vld [vmem:[#allocation3 + $0x58] sm:$0xff]
        %v1885 = vld [vmem:[#allocation3 + $0x60] sm:$0xff]
        %v1886 = vld [vmem:[#allocation3 + $0x68] sm:$0xff]
        %v1887 = vld [vmem:[#allocation3 + $0x70] sm:$0xff]
        %v1888 = vld [vmem:[#allocation3 + $0x78] sm:$0xff]
        %v1889 = vld [vmem:[#allocation3 + $0x80] sm:$0xff]
        %v1890 = vld [vmem:[#allocation3 + $0x88] sm:$0xff]
        %v1891 = vld [vmem:[#allocation3 + $0x90] sm:$0xff]
        %v1892 = vld [vmem:[#allocation3 + $0x98] sm:$0xff]
        %v1893 = vld [vmem:[#allocation3 + $0xa0] sm:$0xff]
        %v1894 = vld [vmem:[#allocation3 + $0xa8] sm:$0xff]
        %v1895 = vld [vmem:[#allocation3 + $0xb0] sm:$0xff]
        %v1896 = vld [vmem:[#allocation3 + $0xb8] sm:$0xff]
        %v1897 = vld [vmem:[#allocation3 + $0xc0] sm:$0xff]
        %v1898 = vld [vmem:[#allocation3 + $0xc8] sm:$0xff]
        %v1899 = vld [vmem:[#allocation3 + $0xd0] sm:$0xff]
        %v1900 = vld [vmem:[#allocation3 + $0xd8] sm:$0xff]
        %v1901 = vld [vmem:[#allocation3 + $0xe0] sm:$0xff]
        %v1902 = vld [vmem:[#allocation3 + $0xe8] sm:$0xff]
        %v1903 = vld [vmem:[#allocation3 + $0xf0] sm:$0xff]
        %v1904 = vld [vmem:[#allocation3 + $0xf8] sm:$0xff]
        %v1905 = vpack.c.bf16 %v1874, %v1873
        %v1906 = vpack.c.bf16 %v1876, %v1875
        %v1907 = vpack.c.bf16 %v1878, %v1877
        %v1908 = vpack.c.bf16 %v1880, %v1879
        %v1909 = vpack.c.bf16 %v1882, %v1881
        %v1910 = vpack.c.bf16 %v1884, %v1883
        %v1911 = vpack.c.bf16 %v1886, %v1885
        %v1912 = vpack.c.bf16 %v1888, %v1887
        %v1913 = vpack.c.bf16 %v1890, %v1889
        %v1914 = vpack.c.bf16 %v1892, %v1891
        %v1915 = vpack.c.bf16 %v1894, %v1893
        %v1916 = vpack.c.bf16 %v1896, %v1895
        %v1917 = vpack.c.bf16 %v1898, %v1897
        %v1918 = vpack.c.bf16 %v1900, %v1899
        %v1919 = vpack.c.bf16 %v1902, %v1901
        %v1920 = vpack.c.bf16 %v1904, %v1903
        %v1921 = vld [vmem:[%s1] sm:$0xf]
        %v1922 = vld [vmem:[%s1 + $0x4] sm:$0xf]
        %v1923 = vld [vmem:[%s1 + $0x8] sm:$0xf]
        %v1924 = vld [vmem:[%s1 + $0xc] sm:$0xf]
        %v1925 = vld [vmem:[%s1 + $0x10] sm:$0x3]
        %v1931 = vunpack.c.l.b16 %v1921
        %v1932 = vunpack.c.l.b16 %v1922
        %v1933 = vunpack.c.l.b16 %v1923
        %v1934 = vunpack.c.l.b16 %v1924
        %v1935 = vunpack.c.l.b16 %v1925
        %v1936 = vpack.c.b16 %v1932, %v1931
        %v1937 = vpack.c.b16 %v1934, %v1933
        %v1938 = vpack.c.b16 %v1935, %v1935
        %vm1941 = vcmask 293888
        %v1943 = vsel %vm1941, %v1905, 0
        %v1946 = vsel %vm1941, %v1906, 0
        %v1949 = vsel %vm1941, %v1907, 0
        %v1952 = vsel %vm1941, %v1908, 0
        %v1955 = vsel %vm1941, %v1909, 0
        %v1958 = vsel %vm1941, %v1910, 0
        %v1961 = vsel %vm1941, %v1911, 0
        %v1964 = vsel %vm1941, %v1912, 0
        %v1967 = vsel %vm1941, %v1913, 0
        %v1970 = vsel %vm1941, %v1914, 0
        %v1973 = vsel %vm1941, %v1915, 0
        %v1976 = vsel %vm1941, %v1916, 0
        %v1979 = vsel %vm1941, %v1917, 0
        %v1982 = vsel %vm1941, %v1918, 0
        %v1985 = vsel %vm1941, %v1919, 0
        %v1988 = vsel %vm1941, %v1920, 0
        %vm1990 = vcmask 1041408
        %v1992 = vsel %vm1990, %v1938, 0
        %1994 = vmatprep.subr.bf16.mxu0 0
        %1995 = vmatpush1.bf16.msra.mxu0 %v1936
        %1996 = vmatprep.subr.bf16.mxu0 0
        %1997 = vmatpush1.bf16.msra.mxu0 %v1937
        %1998 = vmatprep.subr.bf16.mxu0 0
        %1999 = vmatpush1.bf16.msra.mxu0 %v1992
        %2000 = vmatprep.subr.bf16.mxu0 0
        %2001 = vmatpush1.bf16.msra.mxu0 0
        %2002 = vmatprep.subr.bf16.mxu0 0
        %2003 = vmatpush1.bf16.msra.mxu0 0
        %2004 = vmatprep.subr.bf16.mxu0 0
        %2005 = vmatpush1.bf16.msra.mxu0 0
        %2006 = vmatprep.subr.bf16.mxu0 0
        %2007 = vmatpush1.bf16.msra.mxu0 0
        %2008 = vmatprep.subr.bf16.mxu0 0
        %2009 = vmatpush1.bf16.msra.mxu0 0
        %2010 = vmatprep.subr.bf16.mxu0 0
        %2011 = vmatpush1.bf16.msra.mxu0 0
        %2012 = vmatprep.subr.bf16.mxu0 0
        %2013 = vmatpush1.bf16.msra.mxu0 0
        %2014 = vmatprep.subr.bf16.mxu0 0
        %2015 = vmatpush1.bf16.msra.mxu0 0
        %2016 = vmatprep.subr.bf16.mxu0 0
        %2017 = vmatpush1.bf16.msra.mxu0 0
        %2018 = vmatprep.subr.bf16.mxu0 0
        %2019 = vmatpush1.bf16.msra.mxu0 0
        %2020 = vmatprep.subr.bf16.mxu0 0
        %2021 = vmatpush1.bf16.msra.mxu0 0
        %2022 = vmatprep.subr.bf16.mxu0 0
        %2023 = vmatpush1.bf16.msra.mxu0 0
        %2024 = vmatprep.subr.bf16.mxu0 0
        %2025 = vmatpush1.bf16.msra.mxu0 0
        %2026 = vmatprep.mubr.bf16.mxu0 0
        %2027 = vmatmul.mubr.bf16.gmra.mrb[0].mxu0 %v1943
        %v2028 = vpop.f32.mrb[0].mxu0
        %v2029 = vadd.f32 0.0, %v2028
        %v2030 = vpop.f32.mrb[0].mxu0
        %v2031 = vpop.f32.mrb[0].mxu0
        %v2032 = vadd.f32 0.0, %v2031
        %v2033 = vpop.f32.mrb[0].mxu0
        %2034 = vmatprep.mubr.bf16.mxu0 0
        %2035 = vmatmul.mubr.bf16.gmra.mrb[0].mxu0 %v1946
        %v2036 = vpop.f32.mrb[0].mxu0
        %v2037 = vadd.f32 0.0, %v2036
        %v2038 = vpop.f32.mrb[0].mxu0
        %v2039 = vpop.f32.mrb[0].mxu0
        %v2040 = vadd.f32 0.0, %v2039
        %v2041 = vpop.f32.mrb[0].mxu0
        %2042 = vmatprep.mubr.bf16.mxu0 0
        %2043 = vmatmul.mubr.bf16.gmra.mrb[0].mxu0 %v1949
        %v2044 = vpop.f32.mrb[0].mxu0
        %v2045 = vadd.f32 0.0, %v2044
        %v2046 = vpop.f32.mrb[0].mxu0
        %v2047 = vpop.f32.mrb[0].mxu0
        %v2048 = vadd.f32 0.0, %v2047
        %v2049 = vpop.f32.mrb[0].mxu0
        %2050 = vmatprep.mubr.bf16.mxu0 0
        %2051 = vmatmul.mubr.bf16.gmra.mrb[0].mxu0 %v1952
        %v2052 = vpop.f32.mrb[0].mxu0
        %v2053 = vadd.f32 0.0, %v2052
        %v2054 = vpop.f32.mrb[0].mxu0
        %v2055 = vpop.f32.mrb[0].mxu0
        %v2056 = vadd.f32 0.0, %v2055
        %v2057 = vpop.f32.mrb[0].mxu0
        %2058 = vmatprep.mubr.bf16.mxu0 0
        %2059 = vmatmul.mubr.bf16.gmra.mrb[0].mxu0 %v1955
        %v2060 = vpop.f32.mrb[0].mxu0
        %v2061 = vadd.f32 0.0, %v2060
        %v2062 = vpop.f32.mrb[0].mxu0
        %v2063 = vpop.f32.mrb[0].mxu0
        %v2064 = vadd.f32 0.0, %v2063
        %v2065 = vpop.f32.mrb[0].mxu0
        %2066 = vmatprep.mubr.bf16.mxu0 0
        %2067 = vmatmul.mubr.bf16.gmra.mrb[0].mxu0 %v1958
        %v2068 = vpop.f32.mrb[0].mxu0
        %v2069 = vadd.f32 0.0, %v2068
        %v2070 = vpop.f32.mrb[0].mxu0
        %v2071 = vpop.f32.mrb[0].mxu0
        %v2072 = vadd.f32 0.0, %v2071
        %v2073 = vpop.f32.mrb[0].mxu0
        %2074 = vmatprep.mubr.bf16.mxu0 0
        %2075 = vmatmul.mubr.bf16.gmra.mrb[0].mxu0 %v1961
        %v2076 = vpop.f32.mrb[0].mxu0
        %v2077 = vadd.f32 0.0, %v2076
        %v2078 = vpop.f32.mrb[0].mxu0
        %v2079 = vpop.f32.mrb[0].mxu0
        %v2080 = vadd.f32 0.0, %v2079
        %v2081 = vpop.f32.mrb[0].mxu0
        %2082 = vmatprep.mubr.bf16.mxu0 0
        %2083 = vmatmul.mubr.bf16.gmra.mrb[0].mxu0 %v1964
        %v2084 = vpop.f32.mrb[0].mxu0
        %v2085 = vadd.f32 0.0, %v2084
        %v2086 = vpop.f32.mrb[0].mxu0
        %v2087 = vpop.f32.mrb[0].mxu0
        %v2088 = vadd.f32 0.0, %v2087
        %v2089 = vpop.f32.mrb[0].mxu0
        %2090 = vmatprep.mubr.bf16.mxu0 0
        %2091 = vmatmul.mubr.bf16.gmra.mrb[0].mxu0 %v1967
        %v2092 = vpop.f32.mrb[0].mxu0
        %v2093 = vadd.f32 0.0, %v2092
        %v2094 = vpop.f32.mrb[0].mxu0
        %v2095 = vpop.f32.mrb[0].mxu0
        %v2096 = vadd.f32 0.0, %v2095
        %v2097 = vpop.f32.mrb[0].mxu0
        %2098 = vmatprep.mubr.bf16.mxu0 0
        %2099 = vmatmul.mubr.bf16.gmra.mrb[0].mxu0 %v1970
        %v2100 = vpop.f32.mrb[0].mxu0
        %v2101 = vadd.f32 0.0, %v2100
        %v2102 = vpop.f32.mrb[0].mxu0
        %v2103 = vpop.f32.mrb[0].mxu0
        %v2104 = vadd.f32 0.0, %v2103
        %v2105 = vpop.f32.mrb[0].mxu0
        %2106 = vmatprep.mubr.bf16.mxu0 0
        %2107 = vmatmul.mubr.bf16.gmra.mrb[0].mxu0 %v1973
        %v2108 = vpop.f32.mrb[0].mxu0
        %v2109 = vadd.f32 0.0, %v2108
        %v2110 = vpop.f32.mrb[0].mxu0
        %v2111 = vpop.f32.mrb[0].mxu0
        %v2112 = vadd.f32 0.0, %v2111
        %v2113 = vpop.f32.mrb[0].mxu0
        %2114 = vmatprep.mubr.bf16.mxu0 0
        %2115 = vmatmul.mubr.bf16.gmra.mrb[0].mxu0 %v1976
        %v2116 = vpop.f32.mrb[0].mxu0
        %v2117 = vadd.f32 0.0, %v2116
        %v2118 = vpop.f32.mrb[0].mxu0
        %v2119 = vpop.f32.mrb[0].mxu0
        %v2120 = vadd.f32 0.0, %v2119
        %v2121 = vpop.f32.mrb[0].mxu0
        %2122 = vmatprep.mubr.bf16.mxu0 0
        %2123 = vmatmul.mubr.bf16.gmra.mrb[0].mxu0 %v1979
        %v2124 = vpop.f32.mrb[0].mxu0
        %v2125 = vadd.f32 0.0, %v2124
        %v2126 = vpop.f32.mrb[0].mxu0
        %v2127 = vpop.f32.mrb[0].mxu0
        %v2128 = vadd.f32 0.0, %v2127
        %v2129 = vpop.f32.mrb[0].mxu0
        %2130 = vmatprep.mubr.bf16.mxu0 0
        %2131 = vmatmul.mubr.bf16.gmra.mrb[0].mxu0 %v1982
        %v2132 = vpop.f32.mrb[0].mxu0
        %v2133 = vadd.f32 0.0, %v2132
        %v2134 = vpop.f32.mrb[0].mxu0
        %v2135 = vpop.f32.mrb[0].mxu0
        %v2136 = vadd.f32 0.0, %v2135
        %v2137 = vpop.f32.mrb[0].mxu0
        %2138 = vmatprep.mubr.bf16.mxu0 0
        %2139 = vmatmul.mubr.bf16.gmra.mrb[0].mxu0 %v1985
        %v2140 = vpop.f32.mrb[0].mxu0
        %v2141 = vadd.f32 0.0, %v2140
        %v2142 = vpop.f32.mrb[0].mxu0
        %v2143 = vpop.f32.mrb[0].mxu0
        %v2144 = vadd.f32 0.0, %v2143
        %v2145 = vpop.f32.mrb[0].mxu0
        %2146 = vmatprep.mubr.bf16.mxu0 0
        %2147 = vmatmul.mubr.bf16.gmra.mrb[0].mxu0 %v1988
        %v2148 = vpop.f32.mrb[0].mxu0
        %v2149 = vadd.f32 0.0, %v2148
        %v2150 = vpop.f32.mrb[0].mxu0
        %v2151 = vpop.f32.mrb[0].mxu0
        %v2152 = vadd.f32 0.0, %v2151
        %v2153 = vpop.f32.mrb[0].mxu0
        %2154 = vdwg.mxu0
        %v2155 = vmax.f32 %v2029, 0.0
        %v2156 = vmax.f32 %v2032, 0.0
        %v2157 = vmax.f32 %v2037, 0.0
        %v2158 = vmax.f32 %v2040, 0.0
        %v2159 = vmax.f32 %v2045, 0.0
        %v2160 = vmax.f32 %v2048, 0.0
        %v2161 = vmax.f32 %v2053, 0.0
        %v2162 = vmax.f32 %v2056, 0.0
        %v2163 = vmax.f32 %v2061, 0.0
        %v2164 = vmax.f32 %v2064, 0.0
        %v2165 = vmax.f32 %v2069, 0.0
        %v2166 = vmax.f32 %v2072, 0.0
        %v2167 = vmax.f32 %v2077, 0.0
        %v2168 = vmax.f32 %v2080, 0.0
        %v2169 = vmax.f32 %v2085, 0.0
        %v2170 = vmax.f32 %v2088, 0.0
        %v2171 = vmax.f32 %v2093, 0.0
        %v2172 = vmax.f32 %v2096, 0.0
        %v2173 = vmax.f32 %v2101, 0.0
        %v2174 = vmax.f32 %v2104, 0.0
        %v2175 = vmax.f32 %v2109, 0.0
        %v2176 = vmax.f32 %v2112, 0.0
        %v2177 = vmax.f32 %v2117, 0.0
        %v2178 = vmax.f32 %v2120, 0.0
        %v2179 = vmax.f32 %v2125, 0.0
        %v2180 = vmax.f32 %v2128, 0.0
        %v2181 = vmax.f32 %v2133, 0.0
        %v2182 = vmax.f32 %v2136, 0.0
        %v2183 = vmax.f32 %v2141, 0.0
        %v2184 = vmax.f32 %v2144, 0.0
        %v2185 = vmax.f32 %v2149, 0.0
        %v2186 = vmax.f32 %v2152, 0.0
        %2187 = vst [vmem:[%s136] sm:$0xff] %v2155
        %2188 = vst [vmem:[%s136 + $0x8] sm:$0xff] %v2156
        %2189 = vst [vmem:[%s136 + $0x10] sm:$0xff] %v2157
        %2190 = vst [vmem:[%s136 + $0x18] sm:$0xff] %v2158
        %2191 = vst [vmem:[%s136 + $0x20] sm:$0xff] %v2159
        %2192 = vst [vmem:[%s136 + $0x28] sm:$0xff] %v2160
        %2193 = vst [vmem:[%s136 + $0x30] sm:$0xff] %v2161
        %2194 = vst [vmem:[%s136 + $0x38] sm:$0xff] %v2162
        %2195 = vst [vmem:[%s136 + $0x40] sm:$0xff] %v2163
        %2196 = vst [vmem:[%s136 + $0x48] sm:$0xff] %v2164
        %2197 = vst [vmem:[%s136 + $0x50] sm:$0xff] %v2165
        %2198 = vst [vmem:[%s136 + $0x58] sm:$0xff] %v2166
        %2199 = vst [vmem:[%s136 + $0x60] sm:$0xff] %v2167
        %2200 = vst [vmem:[%s136 + $0x68] sm:$0xff] %v2168
        %2201 = vst [vmem:[%s136 + $0x70] sm:$0xff] %v2169
        %2202 = vst [vmem:[%s136 + $0x78] sm:$0xff] %v2170
        %2203 = vst [vmem:[%s136 + $0x80] sm:$0xff] %v2171
        %2204 = vst [vmem:[%s136 + $0x88] sm:$0xff] %v2172
        %2205 = vst [vmem:[%s136 + $0x90] sm:$0xff] %v2173
        %2206 = vst [vmem:[%s136 + $0x98] sm:$0xff] %v2174
        %2207 = vst [vmem:[%s136 + $0xa0] sm:$0xff] %v2175
        %2208 = vst [vmem:[%s136 + $0xa8] sm:$0xff] %v2176
        %2209 = vst [vmem:[%s136 + $0xb0] sm:$0xff] %v2177
        %2210 = vst [vmem:[%s136 + $0xb8] sm:$0xff] %v2178
        %2211 = vst [vmem:[%s136 + $0xc0] sm:$0xff] %v2179
        %2212 = vst [vmem:[%s136 + $0xc8] sm:$0xff] %v2180
        %2213 = vst [vmem:[%s136 + $0xd0] sm:$0xff] %v2181
        %2214 = vst [vmem:[%s136 + $0xd8] sm:$0xff] %v2182
        %2215 = vst [vmem:[%s136 + $0xe0] sm:$0xff] %v2183
        %2216 = vst [vmem:[%s136 + $0xe8] sm:$0xff] %v2184
        %2217 = vst [vmem:[%s136 + $0xf0] sm:$0xff] %v2185
        %2218 = vst [vmem:[%s136 + $0xf8] sm:$0xff] %v2186
        %s2219 = sand.u32 %s71, 1
        %s2220 = scalar_lea.sflag [#allocation5], %s2219
        %s2221 = sand.u32 %s71, 1
        %s2222 = smul.addr %s2221, 256
        %s2223 = scalar_lea.vmem [#allocation4], %s2222
        // Predicated region
        $region29: #{tpu_custom_call.1} parent=27 // pred_check
          %p2224 = pneg %p81
        $region30: #{tpu_custom_call.1} parent=27 // pred_check_branch
          %2226 = sbr.rel (%p2224) target = $region32
        $region31: #{tpu_custom_call.1} parent=27 // pred_region
          %s2228 = ssub.s32 4096, 4096
          %2229 = vsyncadd %s2220, %s2228
          %s2230 = smul.addr %s16, 32
          %s2231 = smul.addr %s2230, 128
          %s2232 = scalar_lea.hbm %s2, %s2231
          %s2233 = sshll.u32 %s2223, 4
          %s2234 = int_to_ptr.vmem [resolvable:$true] %s2233
          %2239 = dma.vmem_to_hbm [thread:$0]  %s2234, 4096, %s2232, %s2220, 128, 128, 8
        $region32: #{tpu_custom_call.1} parent=27 // pred_fallthru
          _
      $region28: #{tpu_custom_call.1} parent=5 // pred_fallthru
        _
      %p2240 = scmp.le.s32.totalorder 2, %s11
      // Predicated region
      $region33: #{tpu_custom_call.1} parent=5 // pred_check
        %p2241 = pneg %p2240
      $region34: #{tpu_custom_call.1} parent=5 // pred_check_branch
        %2243 = sbr.rel (%p2241) target = $region36
      $region35: #{tpu_custom_call.1} parent=5 // pred_region
        %s2244 = ssub.s32 %s11, 2
        // Predicated region
        $region37: #{tpu_custom_call.1} parent=35 // pred_check
          %p2245 = pneg %p87
        $region38: #{tpu_custom_call.1} parent=35 // pred_check_branch
          %2247 = sbr.rel (%p2245) target = $region40
        $region39: #{tpu_custom_call.1} parent=35 // pred_region
          %s2248 = sand.u32 %s72, 1
          %s2249 = scalar_lea.sflag [#allocation5], %s2248
          %s2250 = sand.u32 %s72, 1
          %s2251 = smul.addr %s2250, 256
          %s2252 = scalar_lea.vmem [#allocation4], %s2251
          %2253 = dma.done %s2249, 4096
        $region40: #{tpu_custom_call.1} parent=35 // pred_fallthru
          _
      $region36: #{tpu_custom_call.1} parent=5 // pred_fallthru
        _
    $region6: #{tpu_custom_call.1} parent=1 // loop_footer
      %s15 = sadd.s32 1, %s11
    $region7: #{tpu_custom_call.1} parent=1 // loop_footer_branch
      %10 = sbr.rel target = $region3
    $region8: #{tpu_custom_call.1} parent=1 // loop_exit
      _
    %2254 = vsyncpa [#allocation5], 1
    %s2255 = scalar_lea.sflag [#allocation5], 1
    %2256 = vsyncpa %s2255, 1

</llo_original>
